<compile_context>
chip_gen: v5e
topology: v5e:2x2
jax: 0.10.0
libtpu: 0.0.40
codegen_flags: <defaults>
</compile_context>

<pallas_src>
import math

import jax
import jax.numpy as jnp
from jax.experimental import pallas as pl
from jax.experimental.pallas import tpu as pltpu

# ----------------------------- tiny BERT config ------------------------------
VOCAB = 100
TYPE_VOCAB = 2
MAX_POS = 16
HIDDEN = 32
N_HEADS = 2
HEAD_DIM = HIDDEN // N_HEADS
INTERMEDIATE = 64
N_LAYERS = 2
LN_EPS = 1e-12
NEG_INF = -1e9

VEC_W = 3 * HIDDEN                 # packed-vector row width (96 lanes)
VEC_ROWS = 2 + 8 * N_LAYERS        # emb LN (2 rows) + 8 rows per layer


# ------------------------------- kernel helpers ------------------------------
def _layer_norm(x, gamma, beta, eps=LN_EPS):
    mean = jnp.mean(x, axis=-1, keepdims=True)
    var = jnp.mean((x - mean) ** 2, axis=-1, keepdims=True)
    return (x - mean) * jax.lax.rsqrt(var + eps) * gamma + beta


# --------------------------- fused whole-model kernel -------------------------
def _fused_bert_kernel(emb_ref, bias_ref, wqkv_ref, wo_ref, w1_ref, w2_ref,
                       vecs_ref, o_ref):
    H, I = HIDDEN, INTERMEDIATE

    x = emb_ref[...].astype(jnp.float32)        # (R, H) row slab for this block
    # Block-diagonal (cross-sequence) + key-padding additive bias, built once
    # in the wrapper and reused across all layers / heads.
    bias = bias_ref[0]                          # (R, R)

    # Embedding LayerNorm (rows 0/1 of the packed vector operand).
    x = _layer_norm(x, vecs_ref[0:1, :H], vecs_ref[1:2, :H])

    scale = 1.0 / math.sqrt(HEAD_DIM)
    for l in range(N_LAYERS):                   # static, fused layer loop
        base = 2 + 8 * l
        bqkv = vecs_ref[base:base + 1, :]               # (1, 3H)
        bo = vecs_ref[base + 1:base + 2, :H]
        ln1_g = vecs_ref[base + 2:base + 3, :H]
        ln1_b = vecs_ref[base + 3:base + 4, :H]
        b1 = vecs_ref[base + 4:base + 5, :I]
        b2 = vecs_ref[base + 5:base + 6, :H]
        ln2_g = vecs_ref[base + 6:base + 7, :H]
        ln2_b = vecs_ref[base + 7:base + 8, :H]

        # ---- self-attention: one packed QKV matmul over the whole slab ----
        qkv = (jnp.dot(x, wqkv_ref[l], preferred_element_type=jnp.float32)
               + bqkv)                                   # (R, 3H)

        ctx_heads = []
        for h in range(N_HEADS):                         # static head loop
            c0 = h * HEAD_DIM
            q_h = qkv[:, c0:c0 + HEAD_DIM]               # (R, HD)
            k_h = qkv[:, H + c0:H + c0 + HEAD_DIM]
            v_h = qkv[:, 2 * H + c0:2 * H + c0 + HEAD_DIM]

            s = (jnp.dot(q_h, k_h.T, preferred_element_type=jnp.float32)
                 * scale + bias)                         # (R, R)
            m = jnp.max(s, axis=-1, keepdims=True)
            p = jnp.exp(s - m)
            p = p * pl.reciprocal(jnp.sum(p, axis=-1, keepdims=True),
                                  approx=True)
            ctx_heads.append(jnp.dot(p, v_h,
                                     preferred_element_type=jnp.float32))
        # Lane-concat of head contexts (both live inside one (8,128) tile),
        # then a single merged Wo projection.
        ctx = jnp.concatenate(ctx_heads, axis=-1)        # (R, H)
        attn_out = (jnp.dot(ctx, wo_ref[l], preferred_element_type=jnp.float32)
                    + bo)

        x1 = _layer_norm(x + attn_out, ln1_g, ln1_b)

        # ---- feed-forward ----
        mid = (jnp.dot(x1, w1_ref[l], preferred_element_type=jnp.float32)
               + b1)
        mid = jax.nn.gelu(mid, approximate=True)
        ffn = (jnp.dot(mid, w2_ref[l], preferred_element_type=jnp.float32)
               + b2)
        x = _layer_norm(x1 + ffn, ln2_g, ln2_b)

    o_ref[...] = x.astype(o_ref.dtype)


# ------------------------------- parameter init ------------------------------
def init_params(key):
    def dense(k, shape, scale=0.02):
        return (scale * jax.random.normal(k, shape)).astype(jnp.float32)

    kw, kp, kt, kqkv, ko, k1, k2 = jax.random.split(key, 7)
    L, H, I = N_LAYERS, HIDDEN, INTERMEDIATE
    return {
        "word_emb": dense(kw, (VOCAB, H)),
        "pos_emb": dense(kp, (MAX_POS, H)),
        "type_emb": dense(kt, (TYPE_VOCAB, H)),
        "emb_ln_g": jnp.ones((H,), jnp.float32),
        "emb_ln_b": jnp.zeros((H,), jnp.float32),
        # per-layer weights stacked along a leading layer axis; QKV packed.
        "wqkv": dense(kqkv, (L, H, 3 * H)),
        "bqkv": jnp.zeros((L, 3 * H), jnp.float32),
        "wo": dense(ko, (L, H, H)),
        "bo": jnp.zeros((L, H), jnp.float32),
        "ln1_g": jnp.ones((L, H), jnp.float32),
        "ln1_b": jnp.zeros((L, H), jnp.float32),
        "w1": dense(k1, (L, H, I)),
        "b1": jnp.zeros((L, I), jnp.float32),
        "w2": dense(k2, (L, I, H)),
        "b2": jnp.zeros((L, H), jnp.float32),
        "ln2_g": jnp.ones((L, H), jnp.float32),
        "ln2_b": jnp.zeros((L, H), jnp.float32),
    }


def _pack_vecs(params):
    """Pack the ten tiny LayerNorm/bias vectors into one (VEC_ROWS, 3H) array."""
    def pad(v):
        return jnp.pad(v, (0, VEC_W - v.shape[0]))

    rows = [pad(params["emb_ln_g"]), pad(params["emb_ln_b"])]
    for l in range(N_LAYERS):
        rows += [
            pad(params["bqkv"][l]),
            pad(params["bo"][l]),
            pad(params["ln1_g"][l]),
            pad(params["ln1_b"][l]),
            pad(params["b1"][l]),
            pad(params["b2"][l]),
            pad(params["ln2_g"][l]),
            pad(params["ln2_b"][l]),
        ]
    return jnp.stack(rows, axis=0)          # (VEC_ROWS, 3H)


# ---------------------------------- forward ----------------------------------
def bert_text_encoder_forward(text, params, *, batch_block=None):
    """text: (B, 3, S) = [input_ids, attention_mask, token_type_ids] (float)."""
    input_ids = text[:, 0, :].astype(jnp.int32)     # .long()
    attn_mask = text[:, 1, :].astype(jnp.float32)   # .float()
    segment_ids = text[:, 2, :].astype(jnp.int32)   # .long()
    B, S = input_ids.shape

    # batch_block: sequences per program. Default = B (single program; right
    # for v5e/v6e and tiny batches). Use a divisor of B (< B) on v7x with big
    # batches so the "parallel" grid axis can shard across both TensorCores.
    if batch_block is None:
        batch_block = B
    assert B % batch_block == 0
    G = B // batch_block
    Rb = batch_block * S                    # rows per program (multiple of 8 here)

    # Embedding table gathers (plain-JAX glue).
    pos_ids = jnp.arange(S)
    emb = (params["word_emb"][input_ids]
           + params["pos_emb"][pos_ids][None, :, :]
           + params["type_emb"][segment_ids])        # (B, S, H)
    emb2d = emb.reshape(B * S, HIDDEN)               # (B*S, H) slab

    # Block-diagonal (no cross-sequence attention) + key-padding additive
    # bias, precomputed once per grid block and reused by all layers/heads.
    mask_blk = attn_mask.reshape(G, Rb)                              # (G, Rb)
    pad_bias = (1.0 - mask_blk)[:, None, :] * NEG_INF                # (G, 1, Rb)
    seq_id = jnp.arange(Rb) // S
    blockdiag = jnp.where(seq_id[:, None] == seq_id[None, :], 0.0, NEG_INF)
    bias = pad_bias + blockdiag[None, :, :]                          # (G, Rb, Rb)

    vecs = _pack_vecs(params)                                        # (18, 96)
    L, H, I = N_LAYERS, HIDDEN, INTERMEDIATE

    out2d = pl.pallas_call(
        _fused_bert_kernel,
        out_shape=jax.ShapeDtypeStruct((B * S, HIDDEN), jnp.float32),
        grid=(G,),
        in_specs=[
            pl.BlockSpec((Rb, H), lambda g: (g, 0)),            # embeddings
            pl.BlockSpec((1, Rb, Rb), lambda g: (g, 0, 0)),     # attn bias
            pl.BlockSpec((L, H, 3 * H), lambda g: (0, 0, 0)),   # wqkv
            pl.BlockSpec((L, H, H), lambda g: (0, 0, 0)),       # wo
            pl.BlockSpec((L, H, I), lambda g: (0, 0, 0)),       # w1
            pl.BlockSpec((L, I, H), lambda g: (0, 0, 0)),       # w2
            pl.BlockSpec((VEC_ROWS, VEC_W), lambda g: (0, 0)),  # packed vectors
        ],
        out_specs=pl.BlockSpec((Rb, H), lambda g: (g, 0)),
        compiler_params=pltpu.CompilerParams(
            dimension_semantics=("parallel",)),
    )(emb2d, bias, params["wqkv"], params["wo"], params["w1"], params["w2"],
      vecs)
    return out2d.reshape(B, S, HIDDEN)               # last_hidden_states (B, S, H)


# ------------------------------------ main ------------------------------------
if __name__ == "__main__":
    B, S = 2, 8
    key = jax.random.PRNGKey(0)
    k_ids, k_params = jax.random.split(key)

    ids = jax.random.randint(k_ids, (B, S), 0, VOCAB)
    mask = jnp.ones((B, S), jnp.float32).at[1, 6:].set(0.0)   # pad last 2 tokens of item 1
    segs = jnp.zeros((B, S), jnp.int32).at[:, S // 2:].set(1)

    # text: (batch, 3, seq_len), channels = [input_ids, input_mask, segment_ids]
    text = jnp.stack(
        [ids.astype(jnp.float32), mask, segs.astype(jnp.float32)], axis=1
    )

    params = init_params(k_params)
    fwd = jax.jit(bert_text_encoder_forward)
    out = fwd(text, params)
    out = jax.block_until_ready(out)

    assert out.shape == (B, S, HIDDEN), out.shape
    assert out.dtype == jnp.float32
    assert bool(jnp.all(jnp.isfinite(out)))
    print("KERNEL_OK")
</pallas_src>

<mosaic_0001>
module attributes {stable_mosaic.version = 11 : i64} {
  func.func @_fused_bert_kernel(%arg0: i32, %arg1: memref<16x32xf32, #tpu.memory_space<vmem>>, %arg2: memref<1x16x16xf32, #tpu.memory_space<vmem>>, %arg3: memref<2x32x96xf32, #tpu.memory_space<vmem>>, %arg4: memref<2x32x32xf32, #tpu.memory_space<vmem>>, %arg5: memref<2x32x64xf32, #tpu.memory_space<vmem>>, %arg6: memref<2x64x32xf32, #tpu.memory_space<vmem>>, %arg7: memref<18x96xf32, #tpu.memory_space<vmem>>, %arg8: memref<16x32xf32, #tpu.memory_space<vmem>>) attributes {dimension_semantics = [#tpu.dimension_semantics<parallel>], iteration_bounds = array<i64: 1>, scalar_prefetch = 0 : i64, scratch_operands = 0 : i64, tpu.core_type = #tpu.core_type<tc>, window_params = [{transform_indices = @transform_0, window_bounds = array<i64: 16, 32>}, {transform_indices = @transform_1, window_bounds = array<i64: 1, 16, 16>}, {pipeline_mode = #tpu.pipeline_mode<synchronous>, transform_indices = @transform_2, window_bounds = array<i64: 2, 32, 96>}, {pipeline_mode = #tpu.pipeline_mode<synchronous>, transform_indices = @transform_3, window_bounds = array<i64: 2, 32, 32>}, {pipeline_mode = #tpu.pipeline_mode<synchronous>, transform_indices = @transform_4, window_bounds = array<i64: 2, 32, 64>}, {pipeline_mode = #tpu.pipeline_mode<synchronous>, transform_indices = @transform_5, window_bounds = array<i64: 2, 64, 32>}, {pipeline_mode = #tpu.pipeline_mode<synchronous>, transform_indices = @transform_6, window_bounds = array<i64: 18, 96>}, {transform_indices = @transform_7, window_bounds = array<i64: 16, 32>}]} {
    %c0 = arith.constant 0 : index
    %c0_0 = arith.constant 0 : index
    %0 = vector.load %arg1[%c0, %c0_0] : memref<16x32xf32, #tpu.memory_space<vmem>>, vector<16x32xf32>
    %c0_1 = arith.constant 0 : index
    %c0_2 = arith.constant 0 : index
    %c0_3 = arith.constant 0 : index
    %1 = vector.load %arg2[%c0_1, %c0_2, %c0_3] : memref<1x16x16xf32, #tpu.memory_space<vmem>>, vector<1x16x16xf32>
    %2 = vector.shape_cast %1 : vector<1x16x16xf32> to vector<16x16xf32>
    %c0_4 = arith.constant 0 : index
    %c0_5 = arith.constant 0 : index
    %3 = vector.load %arg7[%c0_4, %c0_5] : memref<18x96xf32, #tpu.memory_space<vmem>>, vector<1x32xf32>
    %c1 = arith.constant 1 : index
    %c0_6 = arith.constant 0 : index
    %4 = vector.load %arg7[%c1, %c0_6] : memref<18x96xf32, #tpu.memory_space<vmem>>, vector<1x32xf32>
    %cst = arith.constant dense<0.000000e+00> : vector<16xf32>
    %5 = vector.multi_reduction <add>, %0, %cst [1] : vector<16x32xf32> to vector<16xf32>
    %6 = vector.shape_cast %5 : vector<16xf32> to vector<16x1xf32>
    %cst_7 = arith.constant 3.200000e+01 : f32
    %7 = vector.broadcast %cst_7 : f32 to vector<16x1xf32>
    %8 = arith.divf %6, %7 : vector<16x1xf32>
    %9 = vector.broadcast %8 : vector<16x1xf32> to vector<16x32xf32>
    %10 = arith.subf %0, %9 : vector<16x32xf32>
    %11 = arith.mulf %10, %10 : vector<16x32xf32>
    %cst_8 = arith.constant dense<0.000000e+00> : vector<16xf32>
    %12 = vector.multi_reduction <add>, %11, %cst_8 [1] : vector<16x32xf32> to vector<16xf32>
    %13 = vector.shape_cast %12 : vector<16xf32> to vector<16x1xf32>
    %cst_9 = arith.constant 3.200000e+01 : f32
    %14 = vector.broadcast %cst_9 : f32 to vector<16x1xf32>
    %15 = arith.divf %13, %14 : vector<16x1xf32>
    %16 = vector.broadcast %8 : vector<16x1xf32> to vector<16x32xf32>
    %17 = arith.subf %0, %16 : vector<16x32xf32>
    %cst_10 = arith.constant 9.99999996E-13 : f32
    %18 = vector.broadcast %cst_10 : f32 to vector<16x1xf32>
    %19 = arith.addf %15, %18 : vector<16x1xf32>
    %20 = math.rsqrt %19 : vector<16x1xf32>
    %21 = vector.broadcast %20 : vector<16x1xf32> to vector<16x32xf32>
    %22 = arith.mulf %17, %21 : vector<16x32xf32>
    %23 = vector.broadcast %3 : vector<1x32xf32> to vector<16x32xf32>
    %24 = arith.mulf %22, %23 : vector<16x32xf32>
    %25 = vector.broadcast %4 : vector<1x32xf32> to vector<16x32xf32>
    %26 = arith.addf %24, %25 : vector<16x32xf32>
    %c2 = arith.constant 2 : index
    %c0_11 = arith.constant 0 : index
    %27 = vector.load %arg7[%c2, %c0_11] : memref<18x96xf32, #tpu.memory_space<vmem>>, vector<1x96xf32>
    %c3 = arith.constant 3 : index
    %c0_12 = arith.constant 0 : index
    %28 = vector.load %arg7[%c3, %c0_12] : memref<18x96xf32, #tpu.memory_space<vmem>>, vector<1x32xf32>
    %c4 = arith.constant 4 : index
    %c0_13 = arith.constant 0 : index
    %29 = vector.load %arg7[%c4, %c0_13] : memref<18x96xf32, #tpu.memory_space<vmem>>, vector<1x32xf32>
    %c5 = arith.constant 5 : index
    %c0_14 = arith.constant 0 : index
    %30 = vector.load %arg7[%c5, %c0_14] : memref<18x96xf32, #tpu.memory_space<vmem>>, vector<1x32xf32>
    %c6 = arith.constant 6 : index
    %c0_15 = arith.constant 0 : index
    %31 = vector.load %arg7[%c6, %c0_15] : memref<18x96xf32, #tpu.memory_space<vmem>>, vector<1x64xf32>
    %c7 = arith.constant 7 : index
    %c0_16 = arith.constant 0 : index
    %32 = vector.load %arg7[%c7, %c0_16] : memref<18x96xf32, #tpu.memory_space<vmem>>, vector<1x32xf32>
    %c8 = arith.constant 8 : index
    %c0_17 = arith.constant 0 : index
    %33 = vector.load %arg7[%c8, %c0_17] : memref<18x96xf32, #tpu.memory_space<vmem>>, vector<1x32xf32>
    %c9 = arith.constant 9 : index
    %c0_18 = arith.constant 0 : index
    %34 = vector.load %arg7[%c9, %c0_18] : memref<18x96xf32, #tpu.memory_space<vmem>>, vector<1x32xf32>
    %c0_19 = arith.constant 0 : index
    %c0_20 = arith.constant 0 : index
    %c0_21 = arith.constant 0 : index
    %35 = vector.load %arg3[%c0_19, %c0_20, %c0_21] : memref<2x32x96xf32, #tpu.memory_space<vmem>>, vector<1x32x96xf32>
    %36 = vector.shape_cast %35 : vector<1x32x96xf32> to vector<32x96xf32>
    %cst_22 = arith.constant dense<0.000000e+00> : vector<16x96xf32>
    %37 = tpu.matmul %26, %36, %cst_22 {dimension_numbers = #tpu.dot_dimension_numbers<[1], [0], [0], [1], [0, 0, 1, 1], [], []>} : vector<16x32xf32>, vector<32x96xf32>, vector<16x96xf32> -> vector<16x96xf32>
    %38 = vector.broadcast %27 : vector<1x96xf32> to vector<16x96xf32>
    %39 = arith.addf %37, %38 : vector<16x96xf32>
    %40 = vector.extract_strided_slice %39 {offsets = [0, 0], sizes = [16, 16], strides = [1, 1]} : vector<16x96xf32> to vector<16x16xf32>
    %41 = vector.extract_strided_slice %39 {offsets = [0, 32], sizes = [16, 16], strides = [1, 1]} : vector<16x96xf32> to vector<16x16xf32>
    %42 = vector.extract_strided_slice %39 {offsets = [0, 64], sizes = [16, 16], strides = [1, 1]} : vector<16x96xf32> to vector<16x16xf32>
    %43 = tpu.transpose %41, [1, 0] : vector<16x16xf32> -> vector<16x16xf32>
    %cst_23 = arith.constant dense<0.000000e+00> : vector<16x16xf32>
    %44 = tpu.matmul %40, %43, %cst_23 {dimension_numbers = #tpu.dot_dimension_numbers<[1], [0], [0], [1], [0, 0, 1, 1], [], []>} : vector<16x16xf32>, vector<16x16xf32>, vector<16x16xf32> -> vector<16x16xf32>
    %cst_24 = arith.constant 2.500000e-01 : f32
    %45 = vector.broadcast %cst_24 : f32 to vector<16x16xf32>
    %46 = arith.mulf %44, %45 : vector<16x16xf32>
    %47 = arith.addf %46, %2 : vector<16x16xf32>
    %cst_25 = arith.constant dense<0xFF800000> : vector<16xf32>
    %48 = vector.multi_reduction <maximumf>, %47, %cst_25 [1] : vector<16x16xf32> to vector<16xf32>
    %49 = vector.shape_cast %48 : vector<16xf32> to vector<16x1xf32>
    %50 = vector.broadcast %49 : vector<16x1xf32> to vector<16x16xf32>
    %51 = arith.subf %47, %50 : vector<16x16xf32>
    %52 = math.exp %51 : vector<16x16xf32>
    %cst_26 = arith.constant dense<0.000000e+00> : vector<16xf32>
    %53 = vector.multi_reduction <add>, %52, %cst_26 [1] : vector<16x16xf32> to vector<16xf32>
    %54 = vector.shape_cast %53 : vector<16xf32> to vector<16x1xf32>
    %55 = tpu.reciprocal %54 {approx = true} : vector<16x1xf32> -> vector<16x1xf32>
    %56 = vector.broadcast %55 : vector<16x1xf32> to vector<16x16xf32>
    %57 = arith.mulf %52, %56 : vector<16x16xf32>
    %cst_27 = arith.constant dense<0.000000e+00> : vector<16x16xf32>
    %58 = tpu.matmul %57, %42, %cst_27 {dimension_numbers = #tpu.dot_dimension_numbers<[1], [0], [0], [1], [0, 0, 1, 1], [], []>} : vector<16x16xf32>, vector<16x16xf32>, vector<16x16xf32> -> vector<16x16xf32>
    %59 = vector.extract_strided_slice %39 {offsets = [0, 16], sizes = [16, 16], strides = [1, 1]} : vector<16x96xf32> to vector<16x16xf32>
    %60 = vector.extract_strided_slice %39 {offsets = [0, 48], sizes = [16, 16], strides = [1, 1]} : vector<16x96xf32> to vector<16x16xf32>
    %61 = vector.extract_strided_slice %39 {offsets = [0, 80], sizes = [16, 16], strides = [1, 1]} : vector<16x96xf32> to vector<16x16xf32>
    %62 = tpu.transpose %60, [1, 0] : vector<16x16xf32> -> vector<16x16xf32>
    %cst_28 = arith.constant dense<0.000000e+00> : vector<16x16xf32>
    %63 = tpu.matmul %59, %62, %cst_28 {dimension_numbers = #tpu.dot_dimension_numbers<[1], [0], [0], [1], [0, 0, 1, 1], [], []>} : vector<16x16xf32>, vector<16x16xf32>, vector<16x16xf32> -> vector<16x16xf32>
    %cst_29 = arith.constant 2.500000e-01 : f32
    %64 = vector.broadcast %cst_29 : f32 to vector<16x16xf32>
    %65 = arith.mulf %63, %64 : vector<16x16xf32>
    %66 = arith.addf %65, %2 : vector<16x16xf32>
    %cst_30 = arith.constant dense<0xFF800000> : vector<16xf32>
    %67 = vector.multi_reduction <maximumf>, %66, %cst_30 [1] : vector<16x16xf32> to vector<16xf32>
    %68 = vector.shape_cast %67 : vector<16xf32> to vector<16x1xf32>
    %69 = vector.broadcast %68 : vector<16x1xf32> to vector<16x16xf32>
    %70 = arith.subf %66, %69 : vector<16x16xf32>
    %71 = math.exp %70 : vector<16x16xf32>
    %cst_31 = arith.constant dense<0.000000e+00> : vector<16xf32>
    %72 = vector.multi_reduction <add>, %71, %cst_31 [1] : vector<16x16xf32> to vector<16xf32>
    %73 = vector.shape_cast %72 : vector<16xf32> to vector<16x1xf32>
    %74 = tpu.reciprocal %73 {approx = true} : vector<16x1xf32> -> vector<16x1xf32>
    %75 = vector.broadcast %74 : vector<16x1xf32> to vector<16x16xf32>
    %76 = arith.mulf %71, %75 : vector<16x16xf32>
    %cst_32 = arith.constant dense<0.000000e+00> : vector<16x16xf32>
    %77 = tpu.matmul %76, %61, %cst_32 {dimension_numbers = #tpu.dot_dimension_numbers<[1], [0], [0], [1], [0, 0, 1, 1], [], []>} : vector<16x16xf32>, vector<16x16xf32>, vector<16x16xf32> -> vector<16x16xf32>
    %78 = tpu.concatenate %58, %77 in 1 : vector<16x16xf32>, vector<16x16xf32> -> vector<16x32xf32>
    %c0_33 = arith.constant 0 : index
    %c0_34 = arith.constant 0 : index
    %c0_35 = arith.constant 0 : index
    %79 = vector.load %arg4[%c0_33, %c0_34, %c0_35] : memref<2x32x32xf32, #tpu.memory_space<vmem>>, vector<1x32x32xf32>
    %80 = vector.shape_cast %79 : vector<1x32x32xf32> to vector<32x32xf32>
    %cst_36 = arith.constant dense<0.000000e+00> : vector<16x32xf32>
    %81 = tpu.matmul %78, %80, %cst_36 {dimension_numbers = #tpu.dot_dimension_numbers<[1], [0], [0], [1], [0, 0, 1, 1], [], []>} : vector<16x32xf32>, vector<32x32xf32>, vector<16x32xf32> -> vector<16x32xf32>
    %82 = vector.broadcast %28 : vector<1x32xf32> to vector<16x32xf32>
    %83 = arith.addf %81, %82 : vector<16x32xf32>
    %84 = arith.addf %26, %83 : vector<16x32xf32>
    %cst_37 = arith.constant dense<0.000000e+00> : vector<16xf32>
    %85 = vector.multi_reduction <add>, %84, %cst_37 [1] : vector<16x32xf32> to vector<16xf32>
    %86 = vector.shape_cast %85 : vector<16xf32> to vector<16x1xf32>
    %cst_38 = arith.constant 3.200000e+01 : f32
    %87 = vector.broadcast %cst_38 : f32 to vector<16x1xf32>
    %88 = arith.divf %86, %87 : vector<16x1xf32>
    %89 = vector.broadcast %88 : vector<16x1xf32> to vector<16x32xf32>
    %90 = arith.subf %84, %89 : vector<16x32xf32>
    %91 = arith.mulf %90, %90 : vector<16x32xf32>
    %cst_39 = arith.constant dense<0.000000e+00> : vector<16xf32>
    %92 = vector.multi_reduction <add>, %91, %cst_39 [1] : vector<16x32xf32> to vector<16xf32>
    %93 = vector.shape_cast %92 : vector<16xf32> to vector<16x1xf32>
    %cst_40 = arith.constant 3.200000e+01 : f32
    %94 = vector.broadcast %cst_40 : f32 to vector<16x1xf32>
    %95 = arith.divf %93, %94 : vector<16x1xf32>
    %96 = vector.broadcast %88 : vector<16x1xf32> to vector<16x32xf32>
    %97 = arith.subf %84, %96 : vector<16x32xf32>
    %cst_41 = arith.constant 9.99999996E-13 : f32
    %98 = vector.broadcast %cst_41 : f32 to vector<16x1xf32>
    %99 = arith.addf %95, %98 : vector<16x1xf32>
    %100 = math.rsqrt %99 : vector<16x1xf32>
    %101 = vector.broadcast %100 : vector<16x1xf32> to vector<16x32xf32>
    %102 = arith.mulf %97, %101 : vector<16x32xf32>
    %103 = vector.broadcast %29 : vector<1x32xf32> to vector<16x32xf32>
    %104 = arith.mulf %102, %103 : vector<16x32xf32>
    %105 = vector.broadcast %30 : vector<1x32xf32> to vector<16x32xf32>
    %106 = arith.addf %104, %105 : vector<16x32xf32>
    %c0_42 = arith.constant 0 : index
    %c0_43 = arith.constant 0 : index
    %c0_44 = arith.constant 0 : index
    %107 = vector.load %arg5[%c0_42, %c0_43, %c0_44] : memref<2x32x64xf32, #tpu.memory_space<vmem>>, vector<1x32x64xf32>
    %108 = vector.shape_cast %107 : vector<1x32x64xf32> to vector<32x64xf32>
    %cst_45 = arith.constant dense<0.000000e+00> : vector<16x64xf32>
    %109 = tpu.matmul %106, %108, %cst_45 {dimension_numbers = #tpu.dot_dimension_numbers<[1], [0], [0], [1], [0, 0, 1, 1], [], []>} : vector<16x32xf32>, vector<32x64xf32>, vector<16x64xf32> -> vector<16x64xf32>
    %110 = vector.broadcast %31 : vector<1x64xf32> to vector<16x64xf32>
    %111 = arith.addf %109, %110 : vector<16x64xf32>
    %112 = arith.mulf %111, %111 : vector<16x64xf32>
    %113 = arith.mulf %111, %112 : vector<16x64xf32>
    %cst_46 = arith.constant 4.471500e-02 : f32
    %114 = vector.broadcast %cst_46 : f32 to vector<16x64xf32>
    %115 = arith.mulf %114, %113 : vector<16x64xf32>
    %116 = arith.addf %111, %115 : vector<16x64xf32>
    %cst_47 = arith.constant 0.797884583 : f32
    %117 = vector.broadcast %cst_47 : f32 to vector<16x64xf32>
    %118 = arith.mulf %117, %116 : vector<16x64xf32>
    %119 = math.tanh %118 : vector<16x64xf32>
    %cst_48 = arith.constant 1.000000e+00 : f32
    %120 = vector.broadcast %cst_48 : f32 to vector<16x64xf32>
    %121 = arith.addf %120, %119 : vector<16x64xf32>
    %cst_49 = arith.constant 5.000000e-01 : f32
    %122 = vector.broadcast %cst_49 : f32 to vector<16x64xf32>
    %123 = arith.mulf %122, %121 : vector<16x64xf32>
    %124 = arith.mulf %111, %123 : vector<16x64xf32>
    %c0_50 = arith.constant 0 : index
    %c0_51 = arith.constant 0 : index
    %c0_52 = arith.constant 0 : index
    %125 = vector.load %arg6[%c0_50, %c0_51, %c0_52] : memref<2x64x32xf32, #tpu.memory_space<vmem>>, vector<1x64x32xf32>
    %126 = vector.shape_cast %125 : vector<1x64x32xf32> to vector<64x32xf32>
    %cst_53 = arith.constant dense<0.000000e+00> : vector<16x32xf32>
    %127 = tpu.matmul %124, %126, %cst_53 {dimension_numbers = #tpu.dot_dimension_numbers<[1], [0], [0], [1], [0, 0, 1, 1], [], []>} : vector<16x64xf32>, vector<64x32xf32>, vector<16x32xf32> -> vector<16x32xf32>
    %128 = vector.broadcast %32 : vector<1x32xf32> to vector<16x32xf32>
    %129 = arith.addf %127, %128 : vector<16x32xf32>
    %130 = arith.addf %106, %129 : vector<16x32xf32>
    %cst_54 = arith.constant dense<0.000000e+00> : vector<16xf32>
    %131 = vector.multi_reduction <add>, %130, %cst_54 [1] : vector<16x32xf32> to vector<16xf32>
    %132 = vector.shape_cast %131 : vector<16xf32> to vector<16x1xf32>
    %cst_55 = arith.constant 3.200000e+01 : f32
    %133 = vector.broadcast %cst_55 : f32 to vector<16x1xf32>
    %134 = arith.divf %132, %133 : vector<16x1xf32>
    %135 = vector.broadcast %134 : vector<16x1xf32> to vector<16x32xf32>
    %136 = arith.subf %130, %135 : vector<16x32xf32>
    %137 = arith.mulf %136, %136 : vector<16x32xf32>
    %cst_56 = arith.constant dense<0.000000e+00> : vector<16xf32>
    %138 = vector.multi_reduction <add>, %137, %cst_56 [1] : vector<16x32xf32> to vector<16xf32>
    %139 = vector.shape_cast %138 : vector<16xf32> to vector<16x1xf32>
    %cst_57 = arith.constant 3.200000e+01 : f32
    %140 = vector.broadcast %cst_57 : f32 to vector<16x1xf32>
    %141 = arith.divf %139, %140 : vector<16x1xf32>
    %142 = vector.broadcast %134 : vector<16x1xf32> to vector<16x32xf32>
    %143 = arith.subf %130, %142 : vector<16x32xf32>
    %cst_58 = arith.constant 9.99999996E-13 : f32
    %144 = vector.broadcast %cst_58 : f32 to vector<16x1xf32>
    %145 = arith.addf %141, %144 : vector<16x1xf32>
    %146 = math.rsqrt %145 : vector<16x1xf32>
    %147 = vector.broadcast %146 : vector<16x1xf32> to vector<16x32xf32>
    %148 = arith.mulf %143, %147 : vector<16x32xf32>
    %149 = vector.broadcast %33 : vector<1x32xf32> to vector<16x32xf32>
    %150 = arith.mulf %148, %149 : vector<16x32xf32>
    %151 = vector.broadcast %34 : vector<1x32xf32> to vector<16x32xf32>
    %152 = arith.addf %150, %151 : vector<16x32xf32>
    %c10 = arith.constant 10 : index
    %c0_59 = arith.constant 0 : index
    %153 = vector.load %arg7[%c10, %c0_59] : memref<18x96xf32, #tpu.memory_space<vmem>>, vector<1x96xf32>
    %c11 = arith.constant 11 : index
    %c0_60 = arith.constant 0 : index
    %154 = vector.load %arg7[%c11, %c0_60] : memref<18x96xf32, #tpu.memory_space<vmem>>, vector<1x32xf32>
    %c12 = arith.constant 12 : index
    %c0_61 = arith.constant 0 : index
    %155 = vector.load %arg7[%c12, %c0_61] : memref<18x96xf32, #tpu.memory_space<vmem>>, vector<1x32xf32>
    %c13 = arith.constant 13 : index
    %c0_62 = arith.constant 0 : index
    %156 = vector.load %arg7[%c13, %c0_62] : memref<18x96xf32, #tpu.memory_space<vmem>>, vector<1x32xf32>
    %c14 = arith.constant 14 : index
    %c0_63 = arith.constant 0 : index
    %157 = vector.load %arg7[%c14, %c0_63] : memref<18x96xf32, #tpu.memory_space<vmem>>, vector<1x64xf32>
    %c15 = arith.constant 15 : index
    %c0_64 = arith.constant 0 : index
    %158 = vector.load %arg7[%c15, %c0_64] : memref<18x96xf32, #tpu.memory_space<vmem>>, vector<1x32xf32>
    %c16 = arith.constant 16 : index
    %c0_65 = arith.constant 0 : index
    %159 = vector.load %arg7[%c16, %c0_65] : memref<18x96xf32, #tpu.memory_space<vmem>>, vector<1x32xf32>
    %c17 = arith.constant 17 : index
    %c0_66 = arith.constant 0 : index
    %160 = vector.load %arg7[%c17, %c0_66] : memref<18x96xf32, #tpu.memory_space<vmem>>, vector<1x32xf32>
    %c1_67 = arith.constant 1 : index
    %c0_68 = arith.constant 0 : index
    %c0_69 = arith.constant 0 : index
    %161 = vector.load %arg3[%c1_67, %c0_68, %c0_69] : memref<2x32x96xf32, #tpu.memory_space<vmem>>, vector<1x32x96xf32>
    %162 = vector.shape_cast %161 : vector<1x32x96xf32> to vector<32x96xf32>
    %cst_70 = arith.constant dense<0.000000e+00> : vector<16x96xf32>
    %163 = tpu.matmul %152, %162, %cst_70 {dimension_numbers = #tpu.dot_dimension_numbers<[1], [0], [0], [1], [0, 0, 1, 1], [], []>} : vector<16x32xf32>, vector<32x96xf32>, vector<16x96xf32> -> vector<16x96xf32>
    %164 = vector.broadcast %153 : vector<1x96xf32> to vector<16x96xf32>
    %165 = arith.addf %163, %164 : vector<16x96xf32>
    %166 = vector.extract_strided_slice %165 {offsets = [0, 0], sizes = [16, 16], strides = [1, 1]} : vector<16x96xf32> to vector<16x16xf32>
    %167 = vector.extract_strided_slice %165 {offsets = [0, 32], sizes = [16, 16], strides = [1, 1]} : vector<16x96xf32> to vector<16x16xf32>
    %168 = vector.extract_strided_slice %165 {offsets = [0, 64], sizes = [16, 16], strides = [1, 1]} : vector<16x96xf32> to vector<16x16xf32>
    %169 = tpu.transpose %167, [1, 0] : vector<16x16xf32> -> vector<16x16xf32>
    %cst_71 = arith.constant dense<0.000000e+00> : vector<16x16xf32>
    %170 = tpu.matmul %166, %169, %cst_71 {dimension_numbers = #tpu.dot_dimension_numbers<[1], [0], [0], [1], [0, 0, 1, 1], [], []>} : vector<16x16xf32>, vector<16x16xf32>, vector<16x16xf32> -> vector<16x16xf32>
    %cst_72 = arith.constant 2.500000e-01 : f32
    %171 = vector.broadcast %cst_72 : f32 to vector<16x16xf32>
    %172 = arith.mulf %170, %171 : vector<16x16xf32>
    %173 = arith.addf %172, %2 : vector<16x16xf32>
    %cst_73 = arith.constant dense<0xFF800000> : vector<16xf32>
    %174 = vector.multi_reduction <maximumf>, %173, %cst_73 [1] : vector<16x16xf32> to vector<16xf32>
    %175 = vector.shape_cast %174 : vector<16xf32> to vector<16x1xf32>
    %176 = vector.broadcast %175 : vector<16x1xf32> to vector<16x16xf32>
    %177 = arith.subf %173, %176 : vector<16x16xf32>
    %178 = math.exp %177 : vector<16x16xf32>
    %cst_74 = arith.constant dense<0.000000e+00> : vector<16xf32>
    %179 = vector.multi_reduction <add>, %178, %cst_74 [1] : vector<16x16xf32> to vector<16xf32>
    %180 = vector.shape_cast %179 : vector<16xf32> to vector<16x1xf32>
    %181 = tpu.reciprocal %180 {approx = true} : vector<16x1xf32> -> vector<16x1xf32>
    %182 = vector.broadcast %181 : vector<16x1xf32> to vector<16x16xf32>
    %183 = arith.mulf %178, %182 : vector<16x16xf32>
    %cst_75 = arith.constant dense<0.000000e+00> : vector<16x16xf32>
    %184 = tpu.matmul %183, %168, %cst_75 {dimension_numbers = #tpu.dot_dimension_numbers<[1], [0], [0], [1], [0, 0, 1, 1], [], []>} : vector<16x16xf32>, vector<16x16xf32>, vector<16x16xf32> -> vector<16x16xf32>
    %185 = vector.extract_strided_slice %165 {offsets = [0, 16], sizes = [16, 16], strides = [1, 1]} : vector<16x96xf32> to vector<16x16xf32>
    %186 = vector.extract_strided_slice %165 {offsets = [0, 48], sizes = [16, 16], strides = [1, 1]} : vector<16x96xf32> to vector<16x16xf32>
    %187 = vector.extract_strided_slice %165 {offsets = [0, 80], sizes = [16, 16], strides = [1, 1]} : vector<16x96xf32> to vector<16x16xf32>
    %188 = tpu.transpose %186, [1, 0] : vector<16x16xf32> -> vector<16x16xf32>
    %cst_76 = arith.constant dense<0.000000e+00> : vector<16x16xf32>
    %189 = tpu.matmul %185, %188, %cst_76 {dimension_numbers = #tpu.dot_dimension_numbers<[1], [0], [0], [1], [0, 0, 1, 1], [], []>} : vector<16x16xf32>, vector<16x16xf32>, vector<16x16xf32> -> vector<16x16xf32>
    %cst_77 = arith.constant 2.500000e-01 : f32
    %190 = vector.broadcast %cst_77 : f32 to vector<16x16xf32>
    %191 = arith.mulf %189, %190 : vector<16x16xf32>
    %192 = arith.addf %191, %2 : vector<16x16xf32>
    %cst_78 = arith.constant dense<0xFF800000> : vector<16xf32>
    %193 = vector.multi_reduction <maximumf>, %192, %cst_78 [1] : vector<16x16xf32> to vector<16xf32>
    %194 = vector.shape_cast %193 : vector<16xf32> to vector<16x1xf32>
    %195 = vector.broadcast %194 : vector<16x1xf32> to vector<16x16xf32>
    %196 = arith.subf %192, %195 : vector<16x16xf32>
    %197 = math.exp %196 : vector<16x16xf32>
    %cst_79 = arith.constant dense<0.000000e+00> : vector<16xf32>
    %198 = vector.multi_reduction <add>, %197, %cst_79 [1] : vector<16x16xf32> to vector<16xf32>
    %199 = vector.shape_cast %198 : vector<16xf32> to vector<16x1xf32>
    %200 = tpu.reciprocal %199 {approx = true} : vector<16x1xf32> -> vector<16x1xf32>
    %201 = vector.broadcast %200 : vector<16x1xf32> to vector<16x16xf32>
    %202 = arith.mulf %197, %201 : vector<16x16xf32>
    %cst_80 = arith.constant dense<0.000000e+00> : vector<16x16xf32>
    %203 = tpu.matmul %202, %187, %cst_80 {dimension_numbers = #tpu.dot_dimension_numbers<[1], [0], [0], [1], [0, 0, 1, 1], [], []>} : vector<16x16xf32>, vector<16x16xf32>, vector<16x16xf32> -> vector<16x16xf32>
    %204 = tpu.concatenate %184, %203 in 1 : vector<16x16xf32>, vector<16x16xf32> -> vector<16x32xf32>
    %c1_81 = arith.constant 1 : index
    %c0_82 = arith.constant 0 : index
    %c0_83 = arith.constant 0 : index
    %205 = vector.load %arg4[%c1_81, %c0_82, %c0_83] : memref<2x32x32xf32, #tpu.memory_space<vmem>>, vector<1x32x32xf32>
    %206 = vector.shape_cast %205 : vector<1x32x32xf32> to vector<32x32xf32>
    %cst_84 = arith.constant dense<0.000000e+00> : vector<16x32xf32>
    %207 = tpu.matmul %204, %206, %cst_84 {dimension_numbers = #tpu.dot_dimension_numbers<[1], [0], [0], [1], [0, 0, 1, 1], [], []>} : vector<16x32xf32>, vector<32x32xf32>, vector<16x32xf32> -> vector<16x32xf32>
    %208 = vector.broadcast %154 : vector<1x32xf32> to vector<16x32xf32>
    %209 = arith.addf %207, %208 : vector<16x32xf32>
    %210 = arith.addf %152, %209 : vector<16x32xf32>
    %cst_85 = arith.constant dense<0.000000e+00> : vector<16xf32>
    %211 = vector.multi_reduction <add>, %210, %cst_85 [1] : vector<16x32xf32> to vector<16xf32>
    %212 = vector.shape_cast %211 : vector<16xf32> to vector<16x1xf32>
    %cst_86 = arith.constant 3.200000e+01 : f32
    %213 = vector.broadcast %cst_86 : f32 to vector<16x1xf32>
    %214 = arith.divf %212, %213 : vector<16x1xf32>
    %215 = vector.broadcast %214 : vector<16x1xf32> to vector<16x32xf32>
    %216 = arith.subf %210, %215 : vector<16x32xf32>
    %217 = arith.mulf %216, %216 : vector<16x32xf32>
    %cst_87 = arith.constant dense<0.000000e+00> : vector<16xf32>
    %218 = vector.multi_reduction <add>, %217, %cst_87 [1] : vector<16x32xf32> to vector<16xf32>
    %219 = vector.shape_cast %218 : vector<16xf32> to vector<16x1xf32>
    %cst_88 = arith.constant 3.200000e+01 : f32
    %220 = vector.broadcast %cst_88 : f32 to vector<16x1xf32>
    %221 = arith.divf %219, %220 : vector<16x1xf32>
    %222 = vector.broadcast %214 : vector<16x1xf32> to vector<16x32xf32>
    %223 = arith.subf %210, %222 : vector<16x32xf32>
    %cst_89 = arith.constant 9.99999996E-13 : f32
    %224 = vector.broadcast %cst_89 : f32 to vector<16x1xf32>
    %225 = arith.addf %221, %224 : vector<16x1xf32>
    %226 = math.rsqrt %225 : vector<16x1xf32>
    %227 = vector.broadcast %226 : vector<16x1xf32> to vector<16x32xf32>
    %228 = arith.mulf %223, %227 : vector<16x32xf32>
    %229 = vector.broadcast %155 : vector<1x32xf32> to vector<16x32xf32>
    %230 = arith.mulf %228, %229 : vector<16x32xf32>
    %231 = vector.broadcast %156 : vector<1x32xf32> to vector<16x32xf32>
    %232 = arith.addf %230, %231 : vector<16x32xf32>
    %c1_90 = arith.constant 1 : index
    %c0_91 = arith.constant 0 : index
    %c0_92 = arith.constant 0 : index
    %233 = vector.load %arg5[%c1_90, %c0_91, %c0_92] : memref<2x32x64xf32, #tpu.memory_space<vmem>>, vector<1x32x64xf32>
    %234 = vector.shape_cast %233 : vector<1x32x64xf32> to vector<32x64xf32>
    %cst_93 = arith.constant dense<0.000000e+00> : vector<16x64xf32>
    %235 = tpu.matmul %232, %234, %cst_93 {dimension_numbers = #tpu.dot_dimension_numbers<[1], [0], [0], [1], [0, 0, 1, 1], [], []>} : vector<16x32xf32>, vector<32x64xf32>, vector<16x64xf32> -> vector<16x64xf32>
    %236 = vector.broadcast %157 : vector<1x64xf32> to vector<16x64xf32>
    %237 = arith.addf %235, %236 : vector<16x64xf32>
    %238 = arith.mulf %237, %237 : vector<16x64xf32>
    %239 = arith.mulf %237, %238 : vector<16x64xf32>
    %cst_94 = arith.constant 4.471500e-02 : f32
    %240 = vector.broadcast %cst_94 : f32 to vector<16x64xf32>
    %241 = arith.mulf %240, %239 : vector<16x64xf32>
    %242 = arith.addf %237, %241 : vector<16x64xf32>
    %cst_95 = arith.constant 0.797884583 : f32
    %243 = vector.broadcast %cst_95 : f32 to vector<16x64xf32>
    %244 = arith.mulf %243, %242 : vector<16x64xf32>
    %245 = math.tanh %244 : vector<16x64xf32>
    %cst_96 = arith.constant 1.000000e+00 : f32
    %246 = vector.broadcast %cst_96 : f32 to vector<16x64xf32>
    %247 = arith.addf %246, %245 : vector<16x64xf32>
    %cst_97 = arith.constant 5.000000e-01 : f32
    %248 = vector.broadcast %cst_97 : f32 to vector<16x64xf32>
    %249 = arith.mulf %248, %247 : vector<16x64xf32>
    %250 = arith.mulf %237, %249 : vector<16x64xf32>
    %c1_98 = arith.constant 1 : index
    %c0_99 = arith.constant 0 : index
    %c0_100 = arith.constant 0 : index
    %251 = vector.load %arg6[%c1_98, %c0_99, %c0_100] : memref<2x64x32xf32, #tpu.memory_space<vmem>>, vector<1x64x32xf32>
    %252 = vector.shape_cast %251 : vector<1x64x32xf32> to vector<64x32xf32>
    %cst_101 = arith.constant dense<0.000000e+00> : vector<16x32xf32>
    %253 = tpu.matmul %250, %252, %cst_101 {dimension_numbers = #tpu.dot_dimension_numbers<[1], [0], [0], [1], [0, 0, 1, 1], [], []>} : vector<16x64xf32>, vector<64x32xf32>, vector<16x32xf32> -> vector<16x32xf32>
    %254 = vector.broadcast %158 : vector<1x32xf32> to vector<16x32xf32>
    %255 = arith.addf %253, %254 : vector<16x32xf32>
    %256 = arith.addf %232, %255 : vector<16x32xf32>
    %cst_102 = arith.constant dense<0.000000e+00> : vector<16xf32>
    %257 = vector.multi_reduction <add>, %256, %cst_102 [1] : vector<16x32xf32> to vector<16xf32>
    %258 = vector.shape_cast %257 : vector<16xf32> to vector<16x1xf32>
    %cst_103 = arith.constant 3.200000e+01 : f32
    %259 = vector.broadcast %cst_103 : f32 to vector<16x1xf32>
    %260 = arith.divf %258, %259 : vector<16x1xf32>
    %261 = vector.broadcast %260 : vector<16x1xf32> to vector<16x32xf32>
    %262 = arith.subf %256, %261 : vector<16x32xf32>
    %263 = arith.mulf %262, %262 : vector<16x32xf32>
    %cst_104 = arith.constant dense<0.000000e+00> : vector<16xf32>
    %264 = vector.multi_reduction <add>, %263, %cst_104 [1] : vector<16x32xf32> to vector<16xf32>
    %265 = vector.shape_cast %264 : vector<16xf32> to vector<16x1xf32>
    %cst_105 = arith.constant 3.200000e+01 : f32
    %266 = vector.broadcast %cst_105 : f32 to vector<16x1xf32>
    %267 = arith.divf %265, %266 : vector<16x1xf32>
    %268 = vector.broadcast %260 : vector<16x1xf32> to vector<16x32xf32>
    %269 = arith.subf %256, %268 : vector<16x32xf32>
    %cst_106 = arith.constant 9.99999996E-13 : f32
    %270 = vector.broadcast %cst_106 : f32 to vector<16x1xf32>
    %271 = arith.addf %267, %270 : vector<16x1xf32>
    %272 = math.rsqrt %271 : vector<16x1xf32>
    %273 = vector.broadcast %272 : vector<16x1xf32> to vector<16x32xf32>
    %274 = arith.mulf %269, %273 : vector<16x32xf32>
    %275 = vector.broadcast %159 : vector<1x32xf32> to vector<16x32xf32>
    %276 = arith.mulf %274, %275 : vector<16x32xf32>
    %277 = vector.broadcast %160 : vector<1x32xf32> to vector<16x32xf32>
    %278 = arith.addf %276, %277 : vector<16x32xf32>
    %c0_107 = arith.constant 0 : index
    %c0_108 = arith.constant 0 : index
    %279 = vector.load %arg8[%c0_107, %c0_108] : memref<16x32xf32, #tpu.memory_space<vmem>>, vector<16x32xf32>
    tpu.vector_store %arg8[%c0_107, %c0_108], %278 {strides = array<i32>} : memref<16x32xf32, #tpu.memory_space<vmem>>, vector<16x32xf32>,
    return
  }
  func.func @transform_0(%arg0: i32) -> (i32, i32) {
    %c0_i32 = arith.constant 0 : i32
    %c0_i32_0 = arith.constant 0 : i32
    return %arg0, %c0_i32 : i32, i32
  }
  func.func @transform_1(%arg0: i32) -> (i32, i32, i32) {
    %c0_i32 = arith.constant 0 : i32
    %c0_i32_0 = arith.constant 0 : i32
    %c0_i32_1 = arith.constant 0 : i32
    return %arg0, %c0_i32, %c0_i32_0 : i32, i32, i32
  }
  func.func @transform_2(%arg0: i32) -> (i32, i32, i32) {
    %c0_i32 = arith.constant 0 : i32
    %c0_i32_0 = arith.constant 0 : i32
    %c0_i32_1 = arith.constant 0 : i32
    %c0_i32_2 = arith.constant 0 : i32
    return %c0_i32, %c0_i32_0, %c0_i32_1 : i32, i32, i32
  }
  func.func @transform_3(%arg0: i32) -> (i32, i32, i32) {
    %c0_i32 = arith.constant 0 : i32
    %c0_i32_0 = arith.constant 0 : i32
    %c0_i32_1 = arith.constant 0 : i32
    %c0_i32_2 = arith.constant 0 : i32
    return %c0_i32, %c0_i32_0, %c0_i32_1 : i32, i32, i32
  }
  func.func @transform_4(%arg0: i32) -> (i32, i32, i32) {
    %c0_i32 = arith.constant 0 : i32
    %c0_i32_0 = arith.constant 0 : i32
    %c0_i32_1 = arith.constant 0 : i32
    %c0_i32_2 = arith.constant 0 : i32
    return %c0_i32, %c0_i32_0, %c0_i32_1 : i32, i32, i32
  }
  func.func @transform_5(%arg0: i32) -> (i32, i32, i32) {
    %c0_i32 = arith.constant 0 : i32
    %c0_i32_0 = arith.constant 0 : i32
    %c0_i32_1 = arith.constant 0 : i32
    %c0_i32_2 = arith.constant 0 : i32
    return %c0_i32, %c0_i32_0, %c0_i32_1 : i32, i32, i32
  }
  func.func @transform_6(%arg0: i32) -> (i32, i32) {
    %c0_i32 = arith.constant 0 : i32
    %c0_i32_0 = arith.constant 0 : i32
    %c0_i32_1 = arith.constant 0 : i32
    return %c0_i32, %c0_i32_0 : i32, i32
  }
  func.func @transform_7(%arg0: i32) -> (i32, i32) {
    %c0_i32 = arith.constant 0 : i32
    %c0_i32_0 = arith.constant 0 : i32
    return %arg0, %c0_i32 : i32, i32
  }
}

</mosaic_0001>

<llo_original>
// kernel: bert_text_encoder_forward.1
$region0: #{bert_text_encoder_forward.1}
  #allocation0 [shape = 'u32[]', space=smem, size = 0x4, offset = 0x4, fixed_abs, tag = 'smem constant byte address 0x4 - core index']
  #allocation1 [shape = 'u32[72,128]{1,0:T(1,128)}', space=vmem, size = 0x9000, scoped, tag = 'internal scratch']
  %s0 = inlined_call_operand.vmem [shape: f32[16,32], index: 0, kind: input, shape index: {}]
  %s1 = inlined_call_operand.vmem [shape: f32[1,16,16], index: 1, kind: input, shape index: {}]
  %s2 = inlined_call_operand.vmem [shape: f32[2,32,96], index: 2, kind: input, shape index: {}]
  %s3 = inlined_call_operand.vmem [shape: f32[2,32,32], index: 3, kind: input, shape index: {}]
  %s4 = inlined_call_operand.vmem [shape: f32[2,32,64], index: 4, kind: input, shape index: {}]
  %s5 = inlined_call_operand.vmem [shape: f32[2,64,32], index: 5, kind: input, shape index: {}]
  %s6 = inlined_call_operand.vmem [shape: f32[18,96], index: 6, kind: input, shape index: {}]
  %s7 = inlined_call_operand.hbm [shape: f32[16,32], index: 7, kind: output, shape index: {}]
  %s8 = sld [smem:[#allocation0]]
  $region38: #{bert_text_encoder_forward.1} parent=0
    _
  %s10 = ssub.s32 1, %s8
  %s11 = scalar_select 0, %s10, %s8
  $region1: #{bert_text_encoder_forward.1} parent=0
    #allocation2 [shape = 'u8[8192]{0}', space=vmem, size = 0x2000, scoped, tag = 'output window, operand 0, single buffered']
    #allocation3 [shape = 's32[1]{0}', space=sflag, size = 0x4, scoped, tag = 'scoped memory for bert_text_encoder_forward.1']
    %12 = vsyncpa [#allocation3], 0
    // Predicated region
    $region2: #{bert_text_encoder_forward.1} parent=1 // pred_check
      _
    $region3: #{bert_text_encoder_forward.1} parent=1 // pred_check_branch
      %14 = sbr.rel (0) target = $region5
    $region4: #{bert_text_encoder_forward.1} parent=1 // pred_region
      _
    $region5: #{bert_text_encoder_forward.1} parent=1 // pred_fallthru
      _
    // Predicated region
    $region6: #{bert_text_encoder_forward.1} parent=1 // pred_check
      _
    $region7: #{bert_text_encoder_forward.1} parent=1 // pred_check_branch
      %16 = sbr.rel (0) target = $region9
    $region8: #{bert_text_encoder_forward.1} parent=1 // pred_region
      _
    $region9: #{bert_text_encoder_forward.1} parent=1 // pred_fallthru
      _
    // Predicated region
    $region10: #{bert_text_encoder_forward.1} parent=1 // pred_check
      _
    $region11: #{bert_text_encoder_forward.1} parent=1 // pred_check_branch
      %18 = sbr.rel (0) target = $region13
    $region12: #{bert_text_encoder_forward.1} parent=1 // pred_region
      _
    $region13: #{bert_text_encoder_forward.1} parent=1 // pred_fallthru
      _
    // Predicated region
    $region14: #{bert_text_encoder_forward.1} parent=1 // pred_check
      _
    $region15: #{bert_text_encoder_forward.1} parent=1 // pred_check_branch
      %20 = sbr.rel (0) target = $region17
    $region16: #{bert_text_encoder_forward.1} parent=1 // pred_region
      _
    $region17: #{bert_text_encoder_forward.1} parent=1 // pred_fallthru
      _
    // Predicated region
    $region18: #{bert_text_encoder_forward.1} parent=1 // pred_check
      _
    $region19: #{bert_text_encoder_forward.1} parent=1 // pred_check_branch
      %22 = sbr.rel (0) target = $region21
    $region20: #{bert_text_encoder_forward.1} parent=1 // pred_region
      _
    $region21: #{bert_text_encoder_forward.1} parent=1 // pred_fallthru
      _
    // Predicated region
    $region22: #{bert_text_encoder_forward.1} parent=1 // pred_check
      _
    $region23: #{bert_text_encoder_forward.1} parent=1 // pred_check_branch
      %24 = sbr.rel (0) target = $region25
    $region24: #{bert_text_encoder_forward.1} parent=1 // pred_region
      _
    $region25: #{bert_text_encoder_forward.1} parent=1 // pred_fallthru
      _
    // Predicated region
    $region26: #{bert_text_encoder_forward.1} parent=1 // pred_check
      _
    $region27: #{bert_text_encoder_forward.1} parent=1 // pred_check_branch
      %26 = sbr.rel (0) target = $region29
    $region28: #{bert_text_encoder_forward.1} parent=1 // pred_region
      _
    $region29: #{bert_text_encoder_forward.1} parent=1 // pred_fallthru
      _
    %v27 = vld [vmem:[%s0] sm:$0xff]
    %v28 = vld [vmem:[%s0 + $0x8] sm:$0xff]
    %v29 = vld [vmem:[%s1] sm:$0xff]
    %v30 = vld [vmem:[%s1 + $0x8] sm:$0xff]
    %v31 = vld [vmem:[%s6] sm:$0x1]
    %v32 = vld [vmem:[%s6 + $0x1] sm:$0x1]
    %vm33 = vcmask 261120
    %v34 = vsel %vm33, %v27, 0.0
    %35 = vadd.xlane.f32.xlu0 %v34
    %v36 = vpop.xlane.xlu0 %35
    %v37 = vsel %vm33, %v28, 0.0
    %38 = vadd.xlane.f32.xlu0 %v37
    %v39 = vpop.xlane.xlu0 %38
    %v40 = vrcp.pop 32.0
    %v41 = vmul.f32 32.0, %v40
    %v42 = vsub.f32 1.0, %v41
    %v43 = vmul.f32 %v40, %v42
    %v44 = vadd.f32 %v40, %v43
    %vm45 = vweird.f32 %v40
    %v46 = vsel %vm45, %v40, %v44
    %v47 = vmul.f32 %v36, %v46
    %v48 = vmul.f32 %v39, %v46
    %v49 = vsub.f32 %v27, %v47
    %v50 = vsub.f32 %v28, %v48
    %v51 = vmul.f32 %v49, %v49
    %v52 = vmul.f32 %v50, %v50
    %v53 = vsel %vm33, %v51, 0.0
    %54 = vadd.xlane.f32.xlu0 %v53
    %v55 = vpop.xlane.xlu0 %54
    %v56 = vsel %vm33, %v52, 0.0
    %57 = vadd.xlane.f32.xlu0 %v56
    %v58 = vpop.xlane.xlu0 %57
    %v59 = vmul.f32 %v55, %v46
    %v60 = vmul.f32 %v58, %v46
    %v61 = vadd.f32 %v59, 1e-12
    %v62 = vadd.f32 %v60, 1e-12
    %v63 = vrsqrt.pop %v61
    %v64 = vmul.f32 %v63, %v61
    %v65 = vmul.f32 %v64, %v63
    %v66 = vmul.f32 0.5, %v65
    %v67 = vsub.f32 1.5, %v66
    %v68 = vmul.f32 %v63, %v67
    %vm69 = vweird.f32 %v61
    %vm70 = vweird.f32 %v63
    %vm71 = vmor %vm69, %vm70
    %v72 = vsel %vm71, %v63, %v68
    %v73 = vrsqrt.pop %v62
    %v74 = vmul.f32 %v73, %v62
    %v75 = vmul.f32 %v74, %v73
    %v76 = vmul.f32 0.5, %v75
    %v77 = vsub.f32 1.5, %v76
    %v78 = vmul.f32 %v73, %v77
    %vm79 = vweird.f32 %v62
    %vm80 = vweird.f32 %v73
    %vm81 = vmor %vm79, %vm80
    %v82 = vsel %vm81, %v73, %v78
    %v83 = vmul.f32 %v49, %v72
    %v84 = vmul.f32 %v50, %v82
    %v85 = vperm.slane %v31, 0
    %v86 = vmul.f32 %v83, %v85
    %v87 = vmul.f32 %v84, %v85
    %v88 = vperm.slane %v32, 0
    %v89 = vadd.f32 %v86, %v88
    %v90 = vadd.f32 %v87, %v88
    %v91 = vld [vmem:[%s6 + $0x2] sm:$0x1]
    %v92 = vld [vmem:[%s6 + $0x3] sm:$0x1]
    %v93 = vld [vmem:[%s6 + $0x4] sm:$0x1]
    %v94 = vld [vmem:[%s6 + $0x5] sm:$0x1]
    %v95 = vld [vmem:[%s6 + $0x6] sm:$0x1]
    %v96 = vld [vmem:[%s6 + $0x7] sm:$0x1]
    %v97 = vld [vmem:[%s6 + $0x8] sm:$0x1]
    %v98 = vld [vmem:[%s6 + $0x9] sm:$0x1]
    %v99 = vld [vmem:[%s2] sm:$0xff]
    %v100 = vld [vmem:[%s2 + $0x8] sm:$0xff]
    %v101 = vld [vmem:[%s2 + $0x10] sm:$0xff]
    %v102 = vld [vmem:[%s2 + $0x18] sm:$0xff]
    %v103 = vperm.slane %v91, 0
    %v105 = vsel %vm33, %v89, 0
    %v108 = vsel %vm33, %v90, 0
    %110 = vmatpush.msra.mxu0 0.0
    %111 = vmatpush.msra.mxu0 0.0
    %112 = vmatpush.msra.mxu0 0.0
    %113 = vmatpush.msra.mxu0 0.0
    %114 = vmatpush.msra.mxu0 0.0
    %115 = vmatpush.msra.mxu0 0.0
    %116 = vmatpush.msra.mxu0 0.0
    %117 = vmatpush.msra.mxu0 0.0
    %118 = vmatpush.msra.mxu0 0.0
    %119 = vmatpush.msra.mxu0 0.0
    %120 = vmatpush.msra.mxu0 0.0
    %121 = vmatpush.msra.mxu0 0.0
    %122 = vmatpush.msra.mxu0 %v102
    %123 = vmatpush.msra.mxu0 %v101
    %124 = vmatpush.msra.mxu0 %v100
    %125 = vmatpush.msra.mxu0 %v99
    %126 = vmatmul.f32.gmra.mxu0 %v105
    %v127 = vpop.f32.mrf.mxu0
    %v128 = vadd.f32 %v103, %v127
    %129 = vmatmul.f32.gmra.mxu0 %v108
    %v130 = vpop.f32.mrf.mxu0
    %v131 = vadd.f32 %v103, %v130
    %132 = vdwg.mxu0
    %135 = vrot.lane.b32.xlu0 %v128, 96
    %v136 = vpop.permute.xlu0 %135
    %137 = vrot.lane.b32.xlu0 %v131, 96
    %v138 = vpop.permute.xlu0 %137
    %vm139 = vcmask 130048
    %v140 = vsel %vm139, %v128, 0
    %v142 = vsel %vm139, %v131, 0
    %v144 = vsel %vm139, %v136, 0
    %v146 = vsel %vm139, %v138, 0
    %148 = vmatpush.xpose.msra.mxu0 0.0
    %149 = vmatpush.xpose.msra.mxu0 0.0
    %150 = vmatpush.xpose.msra.mxu0 0.0
    %151 = vmatpush.xpose.msra.mxu0 0.0
    %152 = vmatpush.xpose.msra.mxu0 0.0
    %153 = vmatpush.xpose.msra.mxu0 0.0
    %154 = vmatpush.xpose.msra.mxu0 0.0
    %155 = vmatpush.xpose.msra.mxu0 0.0
    %156 = vmatpush.xpose.msra.mxu0 0.0
    %157 = vmatpush.xpose.msra.mxu0 0.0
    %158 = vmatpush.xpose.msra.mxu0 0.0
    %159 = vmatpush.xpose.msra.mxu0 0.0
    %160 = vmatpush.xpose.msra.mxu0 0.0
    %161 = vmatpush.xpose.msra.mxu0 0.0
    %162 = vmatpush.xpose.msra.mxu0 %v146
    %163 = vmatpush.xpose.msra.mxu0 %v144
    %164 = vmatmul.f32.gmra.mxu0 %v140
    %v165 = vpop.f32.mrf.mxu0
    %v166 = vadd.f32 0.0, %v165
    %167 = vmatmul.f32.gmra.mxu0 %v142
    %v168 = vpop.f32.mrf.mxu0
    %v169 = vadd.f32 0.0, %v168
    %170 = vdwg.mxu0
    %v171 = vmul.f32 %v166, 0.25
    %v172 = vmul.f32 %v169, 0.25
    %v173 = vadd.f32 %v171, %v29
    %v174 = vadd.f32 %v172, %v30
    %v175 = vsel %vm139, %v173, -inf
    %176 = vmax.xlane.f32.xlu0 %v175
    %v177 = vpop.xlane.xlu0 %176
    %v178 = vsel %vm139, %v174, -inf
    %179 = vmax.xlane.f32.xlu0 %v178
    %v180 = vpop.xlane.xlu0 %179
    %v181 = vsub.f32 %v173, %v177
    %v182 = vsub.f32 %v174, %v180
    %v183 = vmul.f32 %v181, 1.442695
    %v184 = vpow.pop %v183
    %v185 = vmul.f32 %v182, 1.442695
    %v186 = vpow.pop %v185
    %v187 = vsel %vm139, %v184, 0.0
    %188 = vadd.xlane.f32.xlu0 %v187
    %v189 = vpop.xlane.xlu0 %188
    %v190 = vsel %vm139, %v186, 0.0
    %191 = vadd.xlane.f32.xlu0 %v190
    %v192 = vpop.xlane.xlu0 %191
    %v193 = vrcp.pop %v189
    %v194 = vrcp.pop %v192
    %v195 = vmul.f32 %v184, %v193
    %v196 = vmul.f32 %v186, %v194
    %197 = vrot.lane.b32.xlu0 %v128, 64
    %v198 = vpop.permute.xlu0 %197
    %199 = vrot.lane.b32.xlu0 %v131, 64
    %v200 = vpop.permute.xlu0 %199
    %v204 = vsel %vm139, %v195, 0
    %v207 = vsel %vm139, %v196, 0
    %209 = vmatpush.msra.mxu0 0.0
    %210 = vmatpush.msra.mxu0 0.0
    %211 = vmatpush.msra.mxu0 0.0
    %212 = vmatpush.msra.mxu0 0.0
    %213 = vmatpush.msra.mxu0 0.0
    %214 = vmatpush.msra.mxu0 0.0
    %215 = vmatpush.msra.mxu0 0.0
    %216 = vmatpush.msra.mxu0 0.0
    %217 = vmatpush.msra.mxu0 0.0
    %218 = vmatpush.msra.mxu0 0.0
    %219 = vmatpush.msra.mxu0 0.0
    %220 = vmatpush.msra.mxu0 0.0
    %221 = vmatpush.msra.mxu0 0.0
    %222 = vmatpush.msra.mxu0 0.0
    %223 = vmatpush.msra.mxu0 %v200
    %224 = vmatpush.msra.mxu0 %v198
    %225 = vmatmul.f32.gmra.mxu0 %v204
    %v226 = vpop.f32.mrf.mxu0
    %v227 = vadd.f32 0.0, %v226
    %228 = vmatmul.f32.gmra.mxu0 %v207
    %v229 = vpop.f32.mrf.mxu0
    %v230 = vadd.f32 0.0, %v229
    %231 = vdwg.mxu0
    %232 = vrot.lane.b32.xlu0 %v128, 112
    %v233 = vpop.permute.xlu0 %232
    %234 = vrot.lane.b32.xlu0 %v131, 112
    %v235 = vpop.permute.xlu0 %234
    %236 = vrot.lane.b32.xlu0 %v128, 80
    %v237 = vpop.permute.xlu0 %236
    %238 = vrot.lane.b32.xlu0 %v131, 80
    %v239 = vpop.permute.xlu0 %238
    %v240 = vsel %vm139, %v233, 0
    %v242 = vsel %vm139, %v235, 0
    %v244 = vsel %vm139, %v237, 0
    %v246 = vsel %vm139, %v239, 0
    %248 = vmatpush.xpose.msra.mxu0 0.0
    %249 = vmatpush.xpose.msra.mxu0 0.0
    %250 = vmatpush.xpose.msra.mxu0 0.0
    %251 = vmatpush.xpose.msra.mxu0 0.0
    %252 = vmatpush.xpose.msra.mxu0 0.0
    %253 = vmatpush.xpose.msra.mxu0 0.0
    %254 = vmatpush.xpose.msra.mxu0 0.0
    %255 = vmatpush.xpose.msra.mxu0 0.0
    %256 = vmatpush.xpose.msra.mxu0 0.0
    %257 = vmatpush.xpose.msra.mxu0 0.0
    %258 = vmatpush.xpose.msra.mxu0 0.0
    %259 = vmatpush.xpose.msra.mxu0 0.0
    %260 = vmatpush.xpose.msra.mxu0 0.0
    %261 = vmatpush.xpose.msra.mxu0 0.0
    %262 = vmatpush.xpose.msra.mxu0 %v246
    %263 = vmatpush.xpose.msra.mxu0 %v244
    %264 = vmatmul.f32.gmra.mxu0 %v240
    %v265 = vpop.f32.mrf.mxu0
    %v266 = vadd.f32 0.0, %v265
    %267 = vmatmul.f32.gmra.mxu0 %v242
    %v268 = vpop.f32.mrf.mxu0
    %v269 = vadd.f32 0.0, %v268
    %270 = vdwg.mxu0
    %v271 = vmul.f32 %v266, 0.25
    %v272 = vmul.f32 %v269, 0.25
    %v273 = vadd.f32 %v271, %v29
    %v274 = vadd.f32 %v272, %v30
    %v275 = vsel %vm139, %v273, -inf
    %276 = vmax.xlane.f32.xlu0 %v275
    %v277 = vpop.xlane.xlu0 %276
    %v278 = vsel %vm139, %v274, -inf
    %279 = vmax.xlane.f32.xlu0 %v278
    %v280 = vpop.xlane.xlu0 %279
    %v281 = vsub.f32 %v273, %v277
    %v282 = vsub.f32 %v274, %v280
    %v283 = vmul.f32 %v281, 1.442695
    %v284 = vpow.pop %v283
    %v285 = vmul.f32 %v282, 1.442695
    %v286 = vpow.pop %v285
    %v287 = vsel %vm139, %v284, 0.0
    %288 = vadd.xlane.f32.xlu0 %v287
    %v289 = vpop.xlane.xlu0 %288
    %v290 = vsel %vm139, %v286, 0.0
    %291 = vadd.xlane.f32.xlu0 %v290
    %v292 = vpop.xlane.xlu0 %291
    %v293 = vrcp.pop %v289
    %v294 = vrcp.pop %v292
    %v295 = vmul.f32 %v284, %v293
    %v296 = vmul.f32 %v286, %v294
    %297 = vrot.lane.b32.xlu0 %v128, 48
    %v298 = vpop.permute.xlu0 %297
    %299 = vrot.lane.b32.xlu0 %v131, 48
    %v300 = vpop.permute.xlu0 %299
    %v304 = vsel %vm139, %v295, 0
    %v307 = vsel %vm139, %v296, 0
    %309 = vmatpush.msra.mxu0 0.0
    %310 = vmatpush.msra.mxu0 0.0
    %311 = vmatpush.msra.mxu0 0.0
    %312 = vmatpush.msra.mxu0 0.0
    %313 = vmatpush.msra.mxu0 0.0
    %314 = vmatpush.msra.mxu0 0.0
    %315 = vmatpush.msra.mxu0 0.0
    %316 = vmatpush.msra.mxu0 0.0
    %317 = vmatpush.msra.mxu0 0.0
    %318 = vmatpush.msra.mxu0 0.0
    %319 = vmatpush.msra.mxu0 0.0
    %320 = vmatpush.msra.mxu0 0.0
    %321 = vmatpush.msra.mxu0 0.0
    %322 = vmatpush.msra.mxu0 0.0
    %323 = vmatpush.msra.mxu0 %v300
    %324 = vmatpush.msra.mxu0 %v298
    %325 = vmatmul.f32.gmra.mxu0 %v304
    %v326 = vpop.f32.mrf.mxu0
    %v327 = vadd.f32 0.0, %v326
    %328 = vmatmul.f32.gmra.mxu0 %v307
    %v329 = vpop.f32.mrf.mxu0
    %v330 = vadd.f32 0.0, %v329
    %331 = vdwg.mxu0
    %334 = vrot.lane.b32.xlu0 %v327, 16
    %v335 = vpop.permute.xlu0 %334
    %336 = vrot.lane.b32.xlu0 %v330, 16
    %v337 = vpop.permute.xlu0 %336
    %v340 = vsel %vm139, %v227, %v335
    %v341 = vsel %vm139, %v230, %v337
    %v342 = vld [vmem:[%s3] sm:$0xff]
    %v343 = vld [vmem:[%s3 + $0x8] sm:$0xff]
    %v344 = vld [vmem:[%s3 + $0x10] sm:$0xff]
    %v345 = vld [vmem:[%s3 + $0x18] sm:$0xff]
    %v346 = vperm.slane %v92, 0
    %v348 = vsel %vm33, %v340, 0
    %v351 = vsel %vm33, %v341, 0
    %353 = vmatpush.msra.mxu0 0.0
    %354 = vmatpush.msra.mxu0 0.0
    %355 = vmatpush.msra.mxu0 0.0
    %356 = vmatpush.msra.mxu0 0.0
    %357 = vmatpush.msra.mxu0 0.0
    %358 = vmatpush.msra.mxu0 0.0
    %359 = vmatpush.msra.mxu0 0.0
    %360 = vmatpush.msra.mxu0 0.0
    %361 = vmatpush.msra.mxu0 0.0
    %362 = vmatpush.msra.mxu0 0.0
    %363 = vmatpush.msra.mxu0 0.0
    %364 = vmatpush.msra.mxu0 0.0
    %365 = vmatpush.msra.mxu0 %v345
    %366 = vmatpush.msra.mxu0 %v344
    %367 = vmatpush.msra.mxu0 %v343
    %368 = vmatpush.msra.mxu0 %v342
    %369 = vmatmul.f32.gmra.mxu0 %v348
    %v370 = vpop.f32.mrf.mxu0
    %v371 = vadd.f32 %v346, %v370
    %372 = vmatmul.f32.gmra.mxu0 %v351
    %v373 = vpop.f32.mrf.mxu0
    %v374 = vadd.f32 %v346, %v373
    %375 = vdwg.mxu0
    %v376 = vadd.f32 %v89, %v371
    %v377 = vadd.f32 %v90, %v374
    %v378 = vsel %vm33, %v376, 0.0
    %379 = vadd.xlane.f32.xlu0 %v378
    %v380 = vpop.xlane.xlu0 %379
    %v381 = vsel %vm33, %v377, 0.0
    %382 = vadd.xlane.f32.xlu0 %v381
    %v383 = vpop.xlane.xlu0 %382
    %v384 = vmul.f32 %v380, %v46
    %v385 = vmul.f32 %v383, %v46
    %v386 = vsub.f32 %v376, %v384
    %v387 = vsub.f32 %v377, %v385
    %v388 = vmul.f32 %v386, %v386
    %v389 = vmul.f32 %v387, %v387
    %v390 = vsel %vm33, %v388, 0.0
    %391 = vadd.xlane.f32.xlu0 %v390
    %v392 = vpop.xlane.xlu0 %391
    %v393 = vsel %vm33, %v389, 0.0
    %394 = vadd.xlane.f32.xlu0 %v393
    %v395 = vpop.xlane.xlu0 %394
    %v396 = vmul.f32 %v392, %v46
    %v397 = vmul.f32 %v395, %v46
    %v398 = vadd.f32 %v396, 1e-12
    %v399 = vadd.f32 %v397, 1e-12
    %v400 = vrsqrt.pop %v398
    %v401 = vmul.f32 %v400, %v398
    %v402 = vmul.f32 %v401, %v400
    %v403 = vmul.f32 0.5, %v402
    %v404 = vsub.f32 1.5, %v403
    %v405 = vmul.f32 %v400, %v404
    %vm406 = vweird.f32 %v398
    %vm407 = vweird.f32 %v400
    %vm408 = vmor %vm406, %vm407
    %v409 = vsel %vm408, %v400, %v405
    %v410 = vrsqrt.pop %v399
    %v411 = vmul.f32 %v410, %v399
    %v412 = vmul.f32 %v411, %v410
    %v413 = vmul.f32 0.5, %v412
    %v414 = vsub.f32 1.5, %v413
    %v415 = vmul.f32 %v410, %v414
    %vm416 = vweird.f32 %v399
    %vm417 = vweird.f32 %v410
    %vm418 = vmor %vm416, %vm417
    %v419 = vsel %vm418, %v410, %v415
    %v420 = vmul.f32 %v386, %v409
    %v421 = vmul.f32 %v387, %v419
    %v422 = vperm.slane %v93, 0
    %v423 = vmul.f32 %v420, %v422
    %v424 = vmul.f32 %v421, %v422
    %v425 = vperm.slane %v94, 0
    %v426 = vadd.f32 %v423, %v425
    %v427 = vadd.f32 %v424, %v425
    %v428 = vld [vmem:[%s4] sm:$0xff]
    %v429 = vld [vmem:[%s4 + $0x8] sm:$0xff]
    %v430 = vld [vmem:[%s4 + $0x10] sm:$0xff]
    %v431 = vld [vmem:[%s4 + $0x18] sm:$0xff]
    %v432 = vperm.slane %v95, 0
    %v434 = vsel %vm33, %v426, 0
    %v437 = vsel %vm33, %v427, 0
    %439 = vmatpush.msra.mxu0 0.0
    %440 = vmatpush.msra.mxu0 0.0
    %441 = vmatpush.msra.mxu0 0.0
    %442 = vmatpush.msra.mxu0 0.0
    %443 = vmatpush.msra.mxu0 0.0
    %444 = vmatpush.msra.mxu0 0.0
    %445 = vmatpush.msra.mxu0 0.0
    %446 = vmatpush.msra.mxu0 0.0
    %447 = vmatpush.msra.mxu0 0.0
    %448 = vmatpush.msra.mxu0 0.0
    %449 = vmatpush.msra.mxu0 0.0
    %450 = vmatpush.msra.mxu0 0.0
    %451 = vmatpush.msra.mxu0 %v431
    %452 = vmatpush.msra.mxu0 %v430
    %453 = vmatpush.msra.mxu0 %v429
    %454 = vmatpush.msra.mxu0 %v428
    %455 = vmatmul.f32.gmra.mxu0 %v434
    %v456 = vpop.f32.mrf.mxu0
    %v457 = vadd.f32 %v432, %v456
    %458 = vmatmul.f32.gmra.mxu0 %v437
    %v459 = vpop.f32.mrf.mxu0
    %v460 = vadd.f32 %v432, %v459
    %461 = vdwg.mxu0
    %v462 = vmul.f32 %v457, %v457
    %v463 = vmul.f32 %v460, %v460
    %v464 = vmul.f32 %v457, %v462
    %v465 = vmul.f32 %v460, %v463
    %v466 = vmul.f32 %v464, 0.044715
    %v467 = vmul.f32 %v465, 0.044715
    %v468 = vadd.f32 %v457, %v466
    %v469 = vadd.f32 %v460, %v467
    %v470 = vmul.f32 %v468, 0.7978846
    %v471 = vmul.f32 %v469, 0.7978846
    %v472 = vtanh.pop %v470
    %v473 = vtanh.pop %v471
    %v474 = vadd.f32 %v472, 1.0
    %v475 = vadd.f32 %v473, 1.0
    %v476 = vmul.f32 %v474, 0.5
    %v477 = vmul.f32 %v475, 0.5
    %v478 = vmul.f32 %v457, %v476
    %v479 = vmul.f32 %v460, %v477
    %v480 = vld [vmem:[%s5] sm:$0xff]
    %v481 = vld [vmem:[%s5 + $0x8] sm:$0xff]
    %v482 = vld [vmem:[%s5 + $0x10] sm:$0xff]
    %v483 = vld [vmem:[%s5 + $0x18] sm:$0xff]
    %v484 = vld [vmem:[%s5 + $0x20] sm:$0xff]
    %v485 = vld [vmem:[%s5 + $0x28] sm:$0xff]
    %v486 = vld [vmem:[%s5 + $0x30] sm:$0xff]
    %v487 = vld [vmem:[%s5 + $0x38] sm:$0xff]
    %v488 = vperm.slane %v96, 0
    %vm489 = vcmask 523264
    %v491 = vsel %vm489, %v478, 0
    %v494 = vsel %vm489, %v479, 0
    %496 = vmatpush.msra.mxu0 0.0
    %497 = vmatpush.msra.mxu0 0.0
    %498 = vmatpush.msra.mxu0 0.0
    %499 = vmatpush.msra.mxu0 0.0
    %500 = vmatpush.msra.mxu0 0.0
    %501 = vmatpush.msra.mxu0 0.0
    %502 = vmatpush.msra.mxu0 0.0
    %503 = vmatpush.msra.mxu0 0.0
    %504 = vmatpush.msra.mxu0 %v487
    %505 = vmatpush.msra.mxu0 %v486
    %506 = vmatpush.msra.mxu0 %v485
    %507 = vmatpush.msra.mxu0 %v484
    %508 = vmatpush.msra.mxu0 %v483
    %509 = vmatpush.msra.mxu0 %v482
    %510 = vmatpush.msra.mxu0 %v481
    %511 = vmatpush.msra.mxu0 %v480
    %512 = vmatmul.f32.gmra.mxu0 %v491
    %v513 = vpop.f32.mrf.mxu0
    %v514 = vadd.f32 %v488, %v513
    %515 = vmatmul.f32.gmra.mxu0 %v494
    %v516 = vpop.f32.mrf.mxu0
    %v517 = vadd.f32 %v488, %v516
    %518 = vdwg.mxu0
    %v519 = vadd.f32 %v426, %v514
    %v520 = vadd.f32 %v427, %v517
    %v521 = vsel %vm33, %v519, 0.0
    %522 = vadd.xlane.f32.xlu0 %v521
    %v523 = vpop.xlane.xlu0 %522
    %v524 = vsel %vm33, %v520, 0.0
    %525 = vadd.xlane.f32.xlu0 %v524
    %v526 = vpop.xlane.xlu0 %525
    %v527 = vmul.f32 %v523, %v46
    %v528 = vmul.f32 %v526, %v46
    %v529 = vsub.f32 %v519, %v527
    %v530 = vsub.f32 %v520, %v528
    %v531 = vmul.f32 %v529, %v529
    %v532 = vmul.f32 %v530, %v530
    %v533 = vsel %vm33, %v531, 0.0
    %534 = vadd.xlane.f32.xlu0 %v533
    %v535 = vpop.xlane.xlu0 %534
    %v536 = vsel %vm33, %v532, 0.0
    %537 = vadd.xlane.f32.xlu0 %v536
    %v538 = vpop.xlane.xlu0 %537
    %v539 = vmul.f32 %v535, %v46
    %v540 = vmul.f32 %v538, %v46
    %v541 = vadd.f32 %v539, 1e-12
    %v542 = vadd.f32 %v540, 1e-12
    %v543 = vrsqrt.pop %v541
    %v544 = vmul.f32 %v543, %v541
    %v545 = vmul.f32 %v544, %v543
    %v546 = vmul.f32 0.5, %v545
    %v547 = vsub.f32 1.5, %v546
    %v548 = vmul.f32 %v543, %v547
    %vm549 = vweird.f32 %v541
    %vm550 = vweird.f32 %v543
    %vm551 = vmor %vm549, %vm550
    %v552 = vsel %vm551, %v543, %v548
    %v553 = vrsqrt.pop %v542
    %v554 = vmul.f32 %v553, %v542
    %v555 = vmul.f32 %v554, %v553
    %v556 = vmul.f32 0.5, %v555
    %v557 = vsub.f32 1.5, %v556
    %v558 = vmul.f32 %v553, %v557
    %vm559 = vweird.f32 %v542
    %vm560 = vweird.f32 %v553
    %vm561 = vmor %vm559, %vm560
    %v562 = vsel %vm561, %v553, %v558
    %v563 = vmul.f32 %v529, %v552
    %v564 = vmul.f32 %v530, %v562
    %v565 = vperm.slane %v97, 0
    %v566 = vmul.f32 %v563, %v565
    %v567 = vmul.f32 %v564, %v565
    %v568 = vperm.slane %v98, 0
    %v569 = vadd.f32 %v566, %v568
    %v570 = vadd.f32 %v567, %v568
    %v571 = vld [vmem:[%s6 + $0xa] sm:$0x1]
    %v572 = vld [vmem:[%s6 + $0xb] sm:$0x1]
    %v573 = vld [vmem:[%s6 + $0xc] sm:$0x1]
    %v574 = vld [vmem:[%s6 + $0xd] sm:$0x1]
    %v575 = vld [vmem:[%s6 + $0xe] sm:$0x1]
    %v576 = vld [vmem:[%s6 + $0xf] sm:$0x1]
    %v577 = vld [vmem:[%s6 + $0x10] sm:$0x1]
    %v578 = vld [vmem:[%s6 + $0x11] sm:$0x1]
    %s579 = scalar_lea.vmem %s2, 32
    %v580 = vld [vmem:[%s579] sm:$0xff]
    %v581 = vld [vmem:[%s579 + $0x8] sm:$0xff]
    %v582 = vld [vmem:[%s579 + $0x10] sm:$0xff]
    %v583 = vld [vmem:[%s579 + $0x18] sm:$0xff]
    %v584 = vperm.slane %v571, 0
    %v586 = vsel %vm33, %v569, 0
    %v589 = vsel %vm33, %v570, 0
    %591 = vmatpush.msra.mxu0 0.0
    %592 = vmatpush.msra.mxu0 0.0
    %593 = vmatpush.msra.mxu0 0.0
    %594 = vmatpush.msra.mxu0 0.0
    %595 = vmatpush.msra.mxu0 0.0
    %596 = vmatpush.msra.mxu0 0.0
    %597 = vmatpush.msra.mxu0 0.0
    %598 = vmatpush.msra.mxu0 0.0
    %599 = vmatpush.msra.mxu0 0.0
    %600 = vmatpush.msra.mxu0 0.0
    %601 = vmatpush.msra.mxu0 0.0
    %602 = vmatpush.msra.mxu0 0.0
    %603 = vmatpush.msra.mxu0 %v583
    %604 = vmatpush.msra.mxu0 %v582
    %605 = vmatpush.msra.mxu0 %v581
    %606 = vmatpush.msra.mxu0 %v580
    %607 = vmatmul.f32.gmra.mxu0 %v586
    %v608 = vpop.f32.mrf.mxu0
    %v609 = vadd.f32 %v584, %v608
    %610 = vmatmul.f32.gmra.mxu0 %v589
    %v611 = vpop.f32.mrf.mxu0
    %v612 = vadd.f32 %v584, %v611
    %613 = vdwg.mxu0
    %616 = vrot.lane.b32.xlu0 %v609, 96
    %v617 = vpop.permute.xlu0 %616
    %618 = vrot.lane.b32.xlu0 %v612, 96
    %v619 = vpop.permute.xlu0 %618
    %v620 = vsel %vm139, %v609, 0
    %v622 = vsel %vm139, %v612, 0
    %v624 = vsel %vm139, %v617, 0
    %v626 = vsel %vm139, %v619, 0
    %628 = vmatpush.xpose.msra.mxu0 0.0
    %629 = vmatpush.xpose.msra.mxu0 0.0
    %630 = vmatpush.xpose.msra.mxu0 0.0
    %631 = vmatpush.xpose.msra.mxu0 0.0
    %632 = vmatpush.xpose.msra.mxu0 0.0
    %633 = vmatpush.xpose.msra.mxu0 0.0
    %634 = vmatpush.xpose.msra.mxu0 0.0
    %635 = vmatpush.xpose.msra.mxu0 0.0
    %636 = vmatpush.xpose.msra.mxu0 0.0
    %637 = vmatpush.xpose.msra.mxu0 0.0
    %638 = vmatpush.xpose.msra.mxu0 0.0
    %639 = vmatpush.xpose.msra.mxu0 0.0
    %640 = vmatpush.xpose.msra.mxu0 0.0
    %641 = vmatpush.xpose.msra.mxu0 0.0
    %642 = vmatpush.xpose.msra.mxu0 %v626
    %643 = vmatpush.xpose.msra.mxu0 %v624
    %644 = vmatmul.f32.gmra.mxu0 %v620
    %v645 = vpop.f32.mrf.mxu0
    %v646 = vadd.f32 0.0, %v645
    %647 = vmatmul.f32.gmra.mxu0 %v622
    %v648 = vpop.f32.mrf.mxu0
    %v649 = vadd.f32 0.0, %v648
    %650 = vdwg.mxu0
    %v651 = vmul.f32 %v646, 0.25
    %v652 = vmul.f32 %v649, 0.25
    %v653 = vadd.f32 %v651, %v29
    %v654 = vadd.f32 %v652, %v30
    %v655 = vsel %vm139, %v653, -inf
    %656 = vmax.xlane.f32.xlu0 %v655
    %v657 = vpop.xlane.xlu0 %656
    %v658 = vsel %vm139, %v654, -inf
    %659 = vmax.xlane.f32.xlu0 %v658
    %v660 = vpop.xlane.xlu0 %659
    %v661 = vsub.f32 %v653, %v657
    %v662 = vsub.f32 %v654, %v660
    %v663 = vmul.f32 %v661, 1.442695
    %v664 = vpow.pop %v663
    %v665 = vmul.f32 %v662, 1.442695
    %v666 = vpow.pop %v665
    %v667 = vsel %vm139, %v664, 0.0
    %668 = vadd.xlane.f32.xlu0 %v667
    %v669 = vpop.xlane.xlu0 %668
    %v670 = vsel %vm139, %v666, 0.0
    %671 = vadd.xlane.f32.xlu0 %v670
    %v672 = vpop.xlane.xlu0 %671
    %v673 = vrcp.pop %v669
    %v674 = vrcp.pop %v672
    %v675 = vmul.f32 %v664, %v673
    %v676 = vmul.f32 %v666, %v674
    %677 = vrot.lane.b32.xlu0 %v609, 64
    %v678 = vpop.permute.xlu0 %677
    %679 = vrot.lane.b32.xlu0 %v612, 64
    %v680 = vpop.permute.xlu0 %679
    %v684 = vsel %vm139, %v675, 0
    %v687 = vsel %vm139, %v676, 0
    %689 = vmatpush.msra.mxu0 0.0
    %690 = vmatpush.msra.mxu0 0.0
    %691 = vmatpush.msra.mxu0 0.0
    %692 = vmatpush.msra.mxu0 0.0
    %693 = vmatpush.msra.mxu0 0.0
    %694 = vmatpush.msra.mxu0 0.0
    %695 = vmatpush.msra.mxu0 0.0
    %696 = vmatpush.msra.mxu0 0.0
    %697 = vmatpush.msra.mxu0 0.0
    %698 = vmatpush.msra.mxu0 0.0
    %699 = vmatpush.msra.mxu0 0.0
    %700 = vmatpush.msra.mxu0 0.0
    %701 = vmatpush.msra.mxu0 0.0
    %702 = vmatpush.msra.mxu0 0.0
    %703 = vmatpush.msra.mxu0 %v680
    %704 = vmatpush.msra.mxu0 %v678
    %705 = vmatmul.f32.gmra.mxu0 %v684
    %v706 = vpop.f32.mrf.mxu0
    %v707 = vadd.f32 0.0, %v706
    %708 = vmatmul.f32.gmra.mxu0 %v687
    %v709 = vpop.f32.mrf.mxu0
    %v710 = vadd.f32 0.0, %v709
    %711 = vdwg.mxu0
    %712 = vrot.lane.b32.xlu0 %v609, 112
    %v713 = vpop.permute.xlu0 %712
    %714 = vrot.lane.b32.xlu0 %v612, 112
    %v715 = vpop.permute.xlu0 %714
    %716 = vrot.lane.b32.xlu0 %v609, 80
    %v717 = vpop.permute.xlu0 %716
    %718 = vrot.lane.b32.xlu0 %v612, 80
    %v719 = vpop.permute.xlu0 %718
    %v720 = vsel %vm139, %v713, 0
    %v722 = vsel %vm139, %v715, 0
    %v724 = vsel %vm139, %v717, 0
    %v726 = vsel %vm139, %v719, 0
    %728 = vmatpush.xpose.msra.mxu0 0.0
    %729 = vmatpush.xpose.msra.mxu0 0.0
    %730 = vmatpush.xpose.msra.mxu0 0.0
    %731 = vmatpush.xpose.msra.mxu0 0.0
    %732 = vmatpush.xpose.msra.mxu0 0.0
    %733 = vmatpush.xpose.msra.mxu0 0.0
    %734 = vmatpush.xpose.msra.mxu0 0.0
    %735 = vmatpush.xpose.msra.mxu0 0.0
    %736 = vmatpush.xpose.msra.mxu0 0.0
    %737 = vmatpush.xpose.msra.mxu0 0.0
    %738 = vmatpush.xpose.msra.mxu0 0.0
    %739 = vmatpush.xpose.msra.mxu0 0.0
    %740 = vmatpush.xpose.msra.mxu0 0.0
    %741 = vmatpush.xpose.msra.mxu0 0.0
    %742 = vmatpush.xpose.msra.mxu0 %v726
    %743 = vmatpush.xpose.msra.mxu0 %v724
    %744 = vmatmul.f32.gmra.mxu0 %v720
    %v745 = vpop.f32.mrf.mxu0
    %v746 = vadd.f32 0.0, %v745
    %747 = vmatmul.f32.gmra.mxu0 %v722
    %v748 = vpop.f32.mrf.mxu0
    %v749 = vadd.f32 0.0, %v748
    %750 = vdwg.mxu0
    %v751 = vmul.f32 %v746, 0.25
    %v752 = vmul.f32 %v749, 0.25
    %v753 = vadd.f32 %v751, %v29
    %v754 = vadd.f32 %v752, %v30
    %v755 = vsel %vm139, %v753, -inf
    %756 = vmax.xlane.f32.xlu0 %v755
    %v757 = vpop.xlane.xlu0 %756
    %v758 = vsel %vm139, %v754, -inf
    %759 = vmax.xlane.f32.xlu0 %v758
    %v760 = vpop.xlane.xlu0 %759
    %v761 = vsub.f32 %v753, %v757
    %v762 = vsub.f32 %v754, %v760
    %v763 = vmul.f32 %v761, 1.442695
    %v764 = vpow.pop %v763
    %v765 = vmul.f32 %v762, 1.442695
    %v766 = vpow.pop %v765
    %v767 = vsel %vm139, %v764, 0.0
    %768 = vadd.xlane.f32.xlu0 %v767
    %v769 = vpop.xlane.xlu0 %768
    %v770 = vsel %vm139, %v766, 0.0
    %771 = vadd.xlane.f32.xlu0 %v770
    %v772 = vpop.xlane.xlu0 %771
    %v773 = vrcp.pop %v769
    %v774 = vrcp.pop %v772
    %v775 = vmul.f32 %v764, %v773
    %v776 = vmul.f32 %v766, %v774
    %777 = vrot.lane.b32.xlu0 %v609, 48
    %v778 = vpop.permute.xlu0 %777
    %779 = vrot.lane.b32.xlu0 %v612, 48
    %v780 = vpop.permute.xlu0 %779
    %v784 = vsel %vm139, %v775, 0
    %v787 = vsel %vm139, %v776, 0
    %789 = vmatpush.msra.mxu0 0.0
    %790 = vmatpush.msra.mxu0 0.0
    %791 = vmatpush.msra.mxu0 0.0
    %792 = vmatpush.msra.mxu0 0.0
    %793 = vmatpush.msra.mxu0 0.0
    %794 = vmatpush.msra.mxu0 0.0
    %795 = vmatpush.msra.mxu0 0.0
    %796 = vmatpush.msra.mxu0 0.0
    %797 = vmatpush.msra.mxu0 0.0
    %798 = vmatpush.msra.mxu0 0.0
    %799 = vmatpush.msra.mxu0 0.0
    %800 = vmatpush.msra.mxu0 0.0
    %801 = vmatpush.msra.mxu0 0.0
    %802 = vmatpush.msra.mxu0 0.0
    %803 = vmatpush.msra.mxu0 %v780
    %804 = vmatpush.msra.mxu0 %v778
    %805 = vmatmul.f32.gmra.mxu0 %v784
    %v806 = vpop.f32.mrf.mxu0
    %v807 = vadd.f32 0.0, %v806
    %808 = vmatmul.f32.gmra.mxu0 %v787
    %v809 = vpop.f32.mrf.mxu0
    %v810 = vadd.f32 0.0, %v809
    %811 = vdwg.mxu0
    %814 = vrot.lane.b32.xlu0 %v807, 16
    %v815 = vpop.permute.xlu0 %814
    %816 = vrot.lane.b32.xlu0 %v810, 16
    %v817 = vpop.permute.xlu0 %816
    %v820 = vsel %vm139, %v707, %v815
    %v821 = vsel %vm139, %v710, %v817
    %s822 = scalar_lea.vmem %s3, 32
    %v823 = vld [vmem:[%s822] sm:$0xff]
    %v824 = vld [vmem:[%s822 + $0x8] sm:$0xff]
    %v825 = vld [vmem:[%s822 + $0x10] sm:$0xff]
    %v826 = vld [vmem:[%s822 + $0x18] sm:$0xff]
    %v827 = vperm.slane %v572, 0
    %v829 = vsel %vm33, %v820, 0
    %v832 = vsel %vm33, %v821, 0
    %834 = vmatpush.msra.mxu0 0.0
    %835 = vmatpush.msra.mxu0 0.0
    %836 = vmatpush.msra.mxu0 0.0
    %837 = vmatpush.msra.mxu0 0.0
    %838 = vmatpush.msra.mxu0 0.0
    %839 = vmatpush.msra.mxu0 0.0
    %840 = vmatpush.msra.mxu0 0.0
    %841 = vmatpush.msra.mxu0 0.0
    %842 = vmatpush.msra.mxu0 0.0
    %843 = vmatpush.msra.mxu0 0.0
    %844 = vmatpush.msra.mxu0 0.0
    %845 = vmatpush.msra.mxu0 0.0
    %846 = vmatpush.msra.mxu0 %v826
    %847 = vmatpush.msra.mxu0 %v825
    %848 = vmatpush.msra.mxu0 %v824
    %849 = vmatpush.msra.mxu0 %v823
    %850 = vmatmul.f32.gmra.mxu0 %v829
    %v851 = vpop.f32.mrf.mxu0
    %v852 = vadd.f32 %v827, %v851
    %853 = vmatmul.f32.gmra.mxu0 %v832
    %v854 = vpop.f32.mrf.mxu0
    %v855 = vadd.f32 %v827, %v854
    %856 = vdwg.mxu0
    %v857 = vadd.f32 %v569, %v852
    %v858 = vadd.f32 %v570, %v855
    %v859 = vsel %vm33, %v857, 0.0
    %860 = vadd.xlane.f32.xlu0 %v859
    %v861 = vpop.xlane.xlu0 %860
    %v862 = vsel %vm33, %v858, 0.0
    %863 = vadd.xlane.f32.xlu0 %v862
    %v864 = vpop.xlane.xlu0 %863
    %v865 = vmul.f32 %v861, %v46
    %v866 = vmul.f32 %v864, %v46
    %v867 = vsub.f32 %v857, %v865
    %v868 = vsub.f32 %v858, %v866
    %v869 = vmul.f32 %v867, %v867
    %v870 = vmul.f32 %v868, %v868
    %v871 = vsel %vm33, %v869, 0.0
    %872 = vadd.xlane.f32.xlu0 %v871
    %v873 = vpop.xlane.xlu0 %872
    %v874 = vsel %vm33, %v870, 0.0
    %875 = vadd.xlane.f32.xlu0 %v874
    %v876 = vpop.xlane.xlu0 %875
    %v877 = vmul.f32 %v873, %v46
    %v878 = vmul.f32 %v876, %v46
    %v879 = vadd.f32 %v877, 1e-12
    %v880 = vadd.f32 %v878, 1e-12
    %v881 = vrsqrt.pop %v879
    %v882 = vmul.f32 %v881, %v879
    %v883 = vmul.f32 %v882, %v881
    %v884 = vmul.f32 0.5, %v883
    %v885 = vsub.f32 1.5, %v884
    %v886 = vmul.f32 %v881, %v885
    %vm887 = vweird.f32 %v879
    %vm888 = vweird.f32 %v881
    %vm889 = vmor %vm887, %vm888
    %v890 = vsel %vm889, %v881, %v886
    %v891 = vrsqrt.pop %v880
    %v892 = vmul.f32 %v891, %v880
    %v893 = vmul.f32 %v892, %v891
    %v894 = vmul.f32 0.5, %v893
    %v895 = vsub.f32 1.5, %v894
    %v896 = vmul.f32 %v891, %v895
    %vm897 = vweird.f32 %v880
    %vm898 = vweird.f32 %v891
    %vm899 = vmor %vm897, %vm898
    %v900 = vsel %vm899, %v891, %v896
    %v901 = vmul.f32 %v867, %v890
    %v902 = vmul.f32 %v868, %v900
    %v903 = vperm.slane %v573, 0
    %v904 = vmul.f32 %v901, %v903
    %v905 = vmul.f32 %v902, %v903
    %v906 = vperm.slane %v574, 0
    %v907 = vadd.f32 %v904, %v906
    %v908 = vadd.f32 %v905, %v906
    %s909 = scalar_lea.vmem %s4, 32
    %v910 = vld [vmem:[%s909] sm:$0xff]
    %v911 = vld [vmem:[%s909 + $0x8] sm:$0xff]
    %v912 = vld [vmem:[%s909 + $0x10] sm:$0xff]
    %v913 = vld [vmem:[%s909 + $0x18] sm:$0xff]
    %v914 = vperm.slane %v575, 0
    %v916 = vsel %vm33, %v907, 0
    %v919 = vsel %vm33, %v908, 0
    %921 = vmatpush.msra.mxu0 0.0
    %922 = vmatpush.msra.mxu0 0.0
    %923 = vmatpush.msra.mxu0 0.0
    %924 = vmatpush.msra.mxu0 0.0
    %925 = vmatpush.msra.mxu0 0.0
    %926 = vmatpush.msra.mxu0 0.0
    %927 = vmatpush.msra.mxu0 0.0
    %928 = vmatpush.msra.mxu0 0.0
    %929 = vmatpush.msra.mxu0 0.0
    %930 = vmatpush.msra.mxu0 0.0
    %931 = vmatpush.msra.mxu0 0.0
    %932 = vmatpush.msra.mxu0 0.0
    %933 = vmatpush.msra.mxu0 %v913
    %934 = vmatpush.msra.mxu0 %v912
    %935 = vmatpush.msra.mxu0 %v911
    %936 = vmatpush.msra.mxu0 %v910
    %937 = vmatmul.f32.gmra.mxu0 %v916
    %v938 = vpop.f32.mrf.mxu0
    %v939 = vadd.f32 %v914, %v938
    %940 = vmatmul.f32.gmra.mxu0 %v919
    %v941 = vpop.f32.mrf.mxu0
    %v942 = vadd.f32 %v914, %v941
    %943 = vdwg.mxu0
    %v944 = vmul.f32 %v939, %v939
    %v945 = vmul.f32 %v942, %v942
    %v946 = vmul.f32 %v939, %v944
    %v947 = vmul.f32 %v942, %v945
    %v948 = vmul.f32 %v946, 0.044715
    %v949 = vmul.f32 %v947, 0.044715
    %v950 = vadd.f32 %v939, %v948
    %v951 = vadd.f32 %v942, %v949
    %v952 = vmul.f32 %v950, 0.7978846
    %v953 = vmul.f32 %v951, 0.7978846
    %v954 = vtanh.pop %v952
    %v955 = vtanh.pop %v953
    %v956 = vadd.f32 %v954, 1.0
    %v957 = vadd.f32 %v955, 1.0
    %v958 = vmul.f32 %v956, 0.5
    %v959 = vmul.f32 %v957, 0.5
    %v960 = vmul.f32 %v939, %v958
    %v961 = vmul.f32 %v942, %v959
    %s962 = scalar_lea.vmem %s5, 64
    %v963 = vld [vmem:[%s962] sm:$0xff]
    %v964 = vld [vmem:[%s962 + $0x8] sm:$0xff]
    %v965 = vld [vmem:[%s962 + $0x10] sm:$0xff]
    %v966 = vld [vmem:[%s962 + $0x18] sm:$0xff]
    %v967 = vld [vmem:[%s962 + $0x20] sm:$0xff]
    %v968 = vld [vmem:[%s962 + $0x28] sm:$0xff]
    %v969 = vld [vmem:[%s962 + $0x30] sm:$0xff]
    %v970 = vld [vmem:[%s962 + $0x38] sm:$0xff]
    %v971 = vperm.slane %v576, 0
    %v973 = vsel %vm489, %v960, 0
    %v976 = vsel %vm489, %v961, 0
    %978 = vmatpush.msra.mxu0 0.0
    %979 = vmatpush.msra.mxu0 0.0
    %980 = vmatpush.msra.mxu0 0.0
    %981 = vmatpush.msra.mxu0 0.0
    %982 = vmatpush.msra.mxu0 0.0
    %983 = vmatpush.msra.mxu0 0.0
    %984 = vmatpush.msra.mxu0 0.0
    %985 = vmatpush.msra.mxu0 0.0
    %986 = vmatpush.msra.mxu0 %v970
    %987 = vmatpush.msra.mxu0 %v969
    %988 = vmatpush.msra.mxu0 %v968
    %989 = vmatpush.msra.mxu0 %v967
    %990 = vmatpush.msra.mxu0 %v966
    %991 = vmatpush.msra.mxu0 %v965
    %992 = vmatpush.msra.mxu0 %v964
    %993 = vmatpush.msra.mxu0 %v963
    %994 = vmatmul.f32.gmra.mxu0 %v973
    %v995 = vpop.f32.mrf.mxu0
    %v996 = vadd.f32 %v971, %v995
    %997 = vmatmul.f32.gmra.mxu0 %v976
    %v998 = vpop.f32.mrf.mxu0
    %v999 = vadd.f32 %v971, %v998
    %1000 = vdwg.mxu0
    %v1001 = vadd.f32 %v907, %v996
    %v1002 = vadd.f32 %v908, %v999
    %v1003 = vsel %vm33, %v1001, 0.0
    %1004 = vadd.xlane.f32.xlu0 %v1003
    %v1005 = vpop.xlane.xlu0 %1004
    %v1006 = vsel %vm33, %v1002, 0.0
    %1007 = vadd.xlane.f32.xlu0 %v1006
    %v1008 = vpop.xlane.xlu0 %1007
    %v1009 = vmul.f32 %v1005, %v46
    %v1010 = vmul.f32 %v1008, %v46
    %v1011 = vsub.f32 %v1001, %v1009
    %v1012 = vsub.f32 %v1002, %v1010
    %v1013 = vmul.f32 %v1011, %v1011
    %v1014 = vmul.f32 %v1012, %v1012
    %v1015 = vsel %vm33, %v1013, 0.0
    %1016 = vadd.xlane.f32.xlu0 %v1015
    %v1017 = vpop.xlane.xlu0 %1016
    %v1018 = vsel %vm33, %v1014, 0.0
    %1019 = vadd.xlane.f32.xlu0 %v1018
    %v1020 = vpop.xlane.xlu0 %1019
    %v1021 = vmul.f32 %v1017, %v46
    %v1022 = vmul.f32 %v1020, %v46
    %v1023 = vadd.f32 %v1021, 1e-12
    %v1024 = vadd.f32 %v1022, 1e-12
    %v1025 = vrsqrt.pop %v1023
    %v1026 = vmul.f32 %v1025, %v1023
    %v1027 = vmul.f32 %v1026, %v1025
    %v1028 = vmul.f32 0.5, %v1027
    %v1029 = vsub.f32 1.5, %v1028
    %v1030 = vmul.f32 %v1025, %v1029
    %vm1031 = vweird.f32 %v1023
    %vm1032 = vweird.f32 %v1025
    %vm1033 = vmor %vm1031, %vm1032
    %v1034 = vsel %vm1033, %v1025, %v1030
    %v1035 = vrsqrt.pop %v1024
    %v1036 = vmul.f32 %v1035, %v1024
    %v1037 = vmul.f32 %v1036, %v1035
    %v1038 = vmul.f32 0.5, %v1037
    %v1039 = vsub.f32 1.5, %v1038
    %v1040 = vmul.f32 %v1035, %v1039
    %vm1041 = vweird.f32 %v1024
    %vm1042 = vweird.f32 %v1035
    %vm1043 = vmor %vm1041, %vm1042
    %v1044 = vsel %vm1043, %v1035, %v1040
    %v1045 = vmul.f32 %v1011, %v1034
    %v1046 = vmul.f32 %v1012, %v1044
    %v1047 = vperm.slane %v577, 0
    %v1048 = vmul.f32 %v1045, %v1047
    %v1049 = vmul.f32 %v1046, %v1047
    %v1050 = vperm.slane %v578, 0
    %v1051 = vadd.f32 %v1048, %v1050
    %v1052 = vadd.f32 %v1049, %v1050
    %1053 = vst.msk [vmem:[#allocation2] sm:$0xff] %vm33, %v1051
    %1054 = vst.msk [vmem:[#allocation2 + $0x8] sm:$0xff] %vm33, %v1052
    // Predicated region
    $region30: #{bert_text_encoder_forward.1} parent=1 // pred_check
      _
    $region31: #{bert_text_encoder_forward.1} parent=1 // pred_check_branch
      %1056 = sbr.rel (0) target = $region33
    $region32: #{bert_text_encoder_forward.1} parent=1 // pred_region
      %1058 = vsyncadd [#allocation3], 0
      %s1059 = sshll.u32 [#allocation2], 4
      %s1060 = int_to_ptr.vmem [resolvable:$true] %s1059
      %s1061 = sshll.u32 %s7, 4
      %s1062 = int_to_ptr.hbm [resolvable:$true] %s1061
      %1067 = dma.vmem_to_hbm [thread:$0]  %s1060, 256, %s1062, [#allocation3], 128, 128, 8
    $region33: #{bert_text_encoder_forward.1} parent=1 // pred_fallthru
      _
    // Predicated region
    $region34: #{bert_text_encoder_forward.1} parent=1 // pred_check
      _
    $region35: #{bert_text_encoder_forward.1} parent=1 // pred_check_branch
      %1069 = sbr.rel (0) target = $region37
    $region36: #{bert_text_encoder_forward.1} parent=1 // pred_region
      %1071 = dma.done [#allocation3], 256
    $region37: #{bert_text_encoder_forward.1} parent=1 // pred_fallthru
      _
    %1072 = vsyncpa [#allocation3], 1

</llo_original>
